<compile_context>
chip_gen: v5e
topology: v5e:2x2
jax: 0.10.0
libtpu: 0.0.40
codegen_flags: <defaults>
</compile_context>

<pallas_src>
import jax
import jax.numpy as jnp
from jax import lax
from jax.experimental import pallas as pl
from jax.experimental.pallas import tpu as pltpu

# ----------------------------- model hyperparameters ------------------------------------
B = 2            # batch
S = 8            # sequence length
H = 32           # hidden size
NH = 4           # attention heads
HD = H // NH     # head dim
L = 2            # encoder layers
I = 64           # FFN intermediate size
VOCAB = 100      # vocab size
NUM_LABELS = 6   # num_labels of the aspect classifier
LN_EPS = 1e-12   # BERT LayerNorm eps

BS = B * S       # 16  : batch folded into rows (sublanes)
HBS = NH * BS    # 64  : head-major stacked rows for the fused attention matmuls
LANES = 128      # lane width of the packed-parameter blobs

# ----------------------------- packed-parameter layout ----------------------------------
# Weight blob (bf16, [W_ROWS, 128]) -- every row fully lane-dense:
#   per layer l:
#     rows [64l, 64l+32):     lanes 0:96   = W_qkv (q|k|v, [H,3H])   lanes 96:128 = W_o [H,H]
#     rows [64l+32, 64l+64):  lanes 0:64   = W_1 [H,I]               lanes 64:128 = W_2^T [H,I]
#   rows [64L, 64L+32):       lanes 0:NUM_LABELS = fc_w [H,NL]       lanes 64:96  = pool_w [H,H]
#     (the fc matmul is run over all 128 lanes so the final store is lane-dense; the
#      pool_w / zero columns just produce ignored logit lanes)
W_ROWS = 64 * L + 32

# Vector blob (f32, [V_ROWS, 128]) -- biases / LayerNorm params, several per row:
#   row 0:        emb_ln_g 0:32 | emb_ln_b 32:64 | pool_b 64:96
#   row 1:        fc_b 0:NUM_LABELS (rest zero; read as a full [1,128] bias row)
#   rows 2+3l..:  b_qkv 0:96 | b_o 96:128
#                 ln1_g 0:32 | ln1_b 32:64 | ln2_g 64:96 | ln2_b 96:128
#                 b_1 0:64   | b_2 64:96
V_ROWS = 2 + 3 * L


# ----------------------------- in-kernel helpers ----------------------------------------
def _layernorm(x, g, b, eps=LN_EPS):
    # Two independent cross-lane reductions; clamp protects rsqrt from tiny negative
    # f32 cancellation of E[x^2] - E[x]^2 on near-constant rows.
    mu = jnp.mean(x, axis=-1, keepdims=True)
    m2 = jnp.mean(x * x, axis=-1, keepdims=True)
    var = jnp.maximum(m2 - mu * mu, 0.0)
    return (x - mu) * lax.rsqrt(var + eps) * g + b


def _gelu(x):
    # TODO(synk): HF BERT's default activation is exact erf-GELU; tanh approximation used here.
    c = jnp.float32(0.7978845608028654)  # sqrt(2/pi)
    return 0.5 * x * (1.0 + jnp.tanh(c * (x + 0.044715 * x * x * x)))


# ----------------------------- the Pallas kernel -----------------------------------------
def bert_aspect_kernel(
    x_ref,      # [BS, H]   f32   summed (word+pos+type) embeddings, pre-LayerNorm
    bias_ref,   # [HBS,HBS] f32   block-diagonal validity + padding-mask additive bias
    w_ref,      # [W_ROWS,128] bf16  packed weight matrices
    v_ref,      # [V_ROWS,128] f32   packed bias / LayerNorm vectors
    out_ref,    # [BS, 128] f32   sigmoid probs (lane-dense; wrapper slices CLS rows / labels)
):
    f32 = jnp.float32
    bf16 = jnp.bfloat16

    def mat(r0, r1, c0, c1):          # bf16 weight slab
        return w_ref[r0:r1, c0:c1]

    def vec(r, c0, c1):               # f32 [1, n] bias / LN vector
        return v_ref[r:r + 1, c0:c1]

    def to_heads(m):                  # [BS, H] -> [NH*BS, HD], head-major rows
        return jnp.concatenate([m[:, h * HD:(h + 1) * HD] for h in range(NH)], axis=0)

    # hoisted once for all layers (JAX does not CSE broadcasts)
    attn_bias = bias_ref[...]                                              # [HBS, HBS]

    # ---- embeddings LayerNorm (all B*S rows at once) ------------------------------------
    x = _layernorm(x_ref[...], vec(0, 0, H), vec(0, H, 2 * H))             # [BS, H] f32

    # ---- transformer encoder layers (L=2, statically unrolled) --------------------------
    for l in range(L):
        ra = 64 * l           # wqkv | wo row block
        rb = ra + 32          # w1 | w2^T row block
        vr = 2 + 3 * l        # first vector row of this layer

        # fused Q|K|V projection: one bf16 MXU push for all rows and all three projections
        qkv = jnp.dot(x.astype(bf16), mat(ra, ra + 32, 0, 3 * H),
                      preferred_element_type=f32) + vec(vr, 0, 3 * H)      # [BS, 3H]

        # stack heads along rows; row index = h*BS + b*S + sq
        qb = to_heads(qkv[:, 0:H]).astype(bf16)                            # [HBS, HD]
        kb = to_heads(qkv[:, H:2 * H]).astype(bf16)                        # [HBS, HD]
        vb = to_heads(qkv[:, 2 * H:3 * H]).astype(bf16)                    # [HBS, HD]

        # ALL heads'/batches' scores in ONE matmul.  Contract last dims (no explicit K^T);
        # cross-(head,batch) blocks are killed by the -1e9 bias.  1/sqrt(HD) is folded into
        # W_q at pack time, so no per-score scaling here.
        s = lax.dot_general(qb, kb, (((1,), (1,)), ((), ())),
                            preferred_element_type=f32) + attn_bias        # [HBS, HBS]

        # single softmax per layer.  Scores are O(1) and masked entries are <= -1e9, whose
        # exp underflows to exactly 0, so the usual max-subtraction is unnecessary here.
        e = jnp.exp(s)
        denom = jnp.maximum(jnp.sum(e, axis=-1, keepdims=True), 1e-20)     # fully-masked-row safe
        p = e * pl.reciprocal(denom, approx=True)

        # one context matmul for all heads/batches, lane-concat back to [BS, H] in registers
        ctx_h = jnp.dot(p.astype(bf16), vb, preferred_element_type=f32)    # [HBS, HD]
        ctx = jnp.concatenate([ctx_h[h * BS:(h + 1) * BS, :] for h in range(NH)], axis=1)

        attn_out = jnp.dot(ctx.astype(bf16), mat(ra, ra + 32, 3 * H, 4 * H),
                           preferred_element_type=f32) + vec(vr, 3 * H, 4 * H)
        x = _layernorm(x + attn_out, vec(vr + 1, 0, H), vec(vr + 1, H, 2 * H))

        # FFN (W_2 stored transposed: contract on last dims, no transpose in-kernel)
        h1 = _gelu(jnp.dot(x.astype(bf16), mat(rb, rb + 32, 0, I),
                           preferred_element_type=f32) + vec(vr + 2, 0, I))
        ffn = lax.dot_general(h1.astype(bf16), mat(rb, rb + 32, I, I + I),
                              (((1,), (1,)), ((), ())),
                              preferred_element_type=f32) + vec(vr + 2, I, I + H)
        x = _layernorm(x + ffn, vec(vr + 1, 2 * H, 3 * H), vec(vr + 1, 3 * H, 4 * H))

    # ---- pooler + classifier over ALL rows (CLS rows selected in the wrapper) -----------
    fcblk = w_ref[64 * L:64 * L + 32, :]                                   # [H, 128] bf16
    pooled = jnp.tanh(jnp.dot(x.astype(bf16), fcblk[:, 2 * H:3 * H],
                              preferred_element_type=f32) + vec(0, 2 * H, 3 * H))
    # fc over the full 128 lanes -> lane-dense output store; only lanes [0, NUM_LABELS) of
    # the CLS rows are real logits (other lanes are zero / pool_w columns, discarded).
    logits = jnp.dot(pooled.astype(bf16), fcblk,
                     preferred_element_type=f32) + v_ref[1:2, :]           # [BS, 128]
    # numerically-stable sigmoid (one divide over 2 vregs at the very end)
    out_ref[...] = 1.0 / (1.0 + jnp.exp(-logits))


# ----------------------------- wrapper / glue ---------------------------------------------
def pack_params(params):
    """Pack weights into a dense bf16 blob and bias/LN vectors into a small f32 blob."""
    scale = 1.0 / (HD ** 0.5)
    wblob = jnp.zeros((W_ROWS, LANES), jnp.float32)
    vblob = jnp.zeros((V_ROWS, LANES), jnp.float32)

    def setw(r0, c0, m):
        nonlocal wblob
        m = jnp.asarray(m, jnp.float32)
        wblob = wblob.at[r0:r0 + m.shape[0], c0:c0 + m.shape[1]].set(m)

    def setv(r, c0, v):
        nonlocal vblob
        v = jnp.asarray(v, jnp.float32).reshape(-1)
        vblob = vblob.at[r, c0:c0 + v.shape[0]].set(v)

    for l in range(L):
        ra, rb, vr = 64 * l, 64 * l + 32, 2 + 3 * l
        setw(ra, 0, params["wq"][l] * scale)       # 1/sqrt(HD) folded into W_q / b_q
        setw(ra, H, params["wk"][l])
        setw(ra, 2 * H, params["wv"][l])
        setw(ra, 3 * H, params["wo"][l])
        setw(rb, 0, params["w1"][l])
        setw(rb, I, params["w2"][l].T)             # stored transposed: [H, I]
        setv(vr, 0, params["bq"][l] * scale)
        setv(vr, H, params["bk"][l])
        setv(vr, 2 * H, params["bv"][l])
        setv(vr, 3 * H, params["bo"][l])
        setv(vr + 1, 0, params["ln1g"][l])
        setv(vr + 1, H, params["ln1b"][l])
        setv(vr + 1, 2 * H, params["ln2g"][l])
        setv(vr + 1, 3 * H, params["ln2b"][l])
        setv(vr + 2, 0, params["b1"][l])
        setv(vr + 2, I, params["b2"][l])
    rf = 64 * L
    setw(rf, 0, params["fc_w"])
    setw(rf, 2 * H, params["pool_w"])              # co-located in unused fc lanes
    setv(0, 0, params["emb_g"])
    setv(0, H, params["emb_b"])
    setv(0, 2 * H, params["pool_b"])
    setv(1, 0, params["fc_b"])
    return wblob.astype(jnp.bfloat16), vblob


def build_attn_bias(attention_mask):
    """[HBS, HBS] additive bias for the single fused attention matmul per layer:
    0 where the (head, batch) blocks of row/col match and the key is un-padded,
    -1e9 elsewhere (cross-block kill + BERT's additive padding mask)."""
    mask = attention_mask.astype(jnp.float32).reshape(B * S)       # keyed by (b, sk)
    blk = jnp.arange(HBS, dtype=jnp.int32) // S                    # (h*B + b) per row / col
    same = (blk[:, None] == blk[None, :]).astype(jnp.float32)      # [HBS, HBS]
    keep = jnp.tile(mask, NH)[None, :]                             # [1, HBS]
    return (1.0 - same * keep) * jnp.float32(-1e9)


@jax.jit
def aspect_prediction_forward(input_ids, attention_mask, embed_params, wblob, vblob):
    # Glue (plain JAX): embedding table gather + position / token-type embeddings.
    word_emb, pos_emb, type_emb = embed_params
    x = (word_emb[input_ids]
         + pos_emb[None, :S, :]
         + type_emb[0][None, None, :]).astype(jnp.float32)         # [B, S, H]
    x_flat = x.reshape(BS, H)                                      # batch folded into rows
    attn_bias = build_attn_bias(attention_mask)                    # [HBS, HBS]

    vmem = pl.BlockSpec(memory_space=pltpu.MemorySpace.VMEM)
    probs_full = pl.pallas_call(
        bert_aspect_kernel,
        out_shape=jax.ShapeDtypeStruct((BS, LANES), jnp.float32),
        in_specs=[vmem, vmem, vmem, vmem],     # everything (~70 KB) resident in VMEM: no grid
        out_specs=vmem,
    )(x_flat, attn_bias, wblob, vblob)
    # CLS row of every batch element; only the first NUM_LABELS lanes are real probabilities.
    return probs_full[0::S, :NUM_LABELS]


def init_params(key):
    keys = jax.random.split(key, 11)
    std = jnp.float32(0.02)

    def nrm(k, shape):
        return jax.random.normal(k, shape, jnp.float32) * std

    f32 = jnp.float32
    return dict(
        word_emb=nrm(keys[0], (VOCAB, H)),
        pos_emb=nrm(keys[1], (S, H)),
        type_emb=nrm(keys[2], (2, H)),
        emb_g=jnp.ones((1, H), f32), emb_b=jnp.zeros((1, H), f32),
        wq=nrm(keys[3], (L, H, H)), bq=jnp.zeros((L, H), f32),
        wk=nrm(keys[4], (L, H, H)), bk=jnp.zeros((L, H), f32),
        wv=nrm(keys[5], (L, H, H)), bv=jnp.zeros((L, H), f32),
        wo=nrm(keys[6], (L, H, H)), bo=jnp.zeros((L, H), f32),
        ln1g=jnp.ones((L, H), f32), ln1b=jnp.zeros((L, H), f32),
        w1=nrm(keys[7], (L, H, I)), b1=jnp.zeros((L, I), f32),
        w2=nrm(keys[8], (L, I, H)), b2=jnp.zeros((L, H), f32),
        ln2g=jnp.ones((L, H), f32), ln2b=jnp.zeros((L, H), f32),
        pool_w=nrm(keys[9], (H, H)), pool_b=jnp.zeros((1, H), f32),
        fc_w=nrm(keys[10], (H, NUM_LABELS)), fc_b=jnp.zeros((1, NUM_LABELS), f32),
    )


if __name__ == "__main__":
    key = jax.random.PRNGKey(0)
    pkey, ikey = jax.random.split(key)

    params = init_params(pkey)
    wblob, vblob = pack_params(params)      # packed once; two small DMAs per call
    embed_params = (params["word_emb"], params["pos_emb"], params["type_emb"])

    input_ids = jax.random.randint(ikey, (B, S), 0, VOCAB, dtype=jnp.int32)
    # second example has two padding tokens masked out
    attention_mask = jnp.array(
        [[1] * S, [1] * (S - 2) + [0, 0]], dtype=jnp.int32)

    probs = aspect_prediction_forward(input_ids, attention_mask, embed_params, wblob, vblob)
    probs = jax.block_until_ready(probs)

    assert probs.shape == (B, NUM_LABELS)
    assert bool(jnp.all(jnp.isfinite(probs)))
    assert bool(jnp.all((probs >= 0.0) & (probs <= 1.0)))
    print("KERNEL_OK")
</pallas_src>

<mosaic_0001>
module attributes {stable_mosaic.version = 11 : i64} {
  func.func @bert_aspect_kernel(%arg0: memref<16x32xf32, #tpu.memory_space<vmem>>, %arg1: memref<64x64xf32, #tpu.memory_space<vmem>>, %arg2: memref<160x128xbf16, #tpu.memory_space<vmem>>, %arg3: memref<8x128xf32, #tpu.memory_space<vmem>>, %arg4: memref<16x128xf32, #tpu.memory_space<vmem>>) attributes {dimension_semantics = [], scalar_prefetch = 0 : i64, scratch_operands = 0 : i64, tpu.core_type = #tpu.core_type<tc>} {
    %c0 = arith.constant 0 : index
    %c0_0 = arith.constant 0 : index
    %0 = vector.load %arg1[%c0, %c0_0] : memref<64x64xf32, #tpu.memory_space<vmem>>, vector<64x64xf32>
    %c0_1 = arith.constant 0 : index
    %c0_2 = arith.constant 0 : index
    %1 = vector.load %arg0[%c0_1, %c0_2] : memref<16x32xf32, #tpu.memory_space<vmem>>, vector<16x32xf32>
    %c0_3 = arith.constant 0 : index
    %c0_4 = arith.constant 0 : index
    %2 = vector.load %arg3[%c0_3, %c0_4] : memref<8x128xf32, #tpu.memory_space<vmem>>, vector<1x32xf32>
    %c0_5 = arith.constant 0 : index
    %c32 = arith.constant 32 : index
    %3 = vector.load %arg3[%c0_5, %c32] : memref<8x128xf32, #tpu.memory_space<vmem>>, vector<1x32xf32>
    %cst = arith.constant dense<0.000000e+00> : vector<16xf32>
    %4 = vector.multi_reduction <add>, %1, %cst [1] : vector<16x32xf32> to vector<16xf32>
    %5 = vector.shape_cast %4 : vector<16xf32> to vector<16x1xf32>
    %cst_6 = arith.constant 3.200000e+01 : f32
    %6 = vector.broadcast %cst_6 : f32 to vector<16x1xf32>
    %7 = arith.divf %5, %6 : vector<16x1xf32>
    %8 = arith.mulf %1, %1 : vector<16x32xf32>
    %cst_7 = arith.constant dense<0.000000e+00> : vector<16xf32>
    %9 = vector.multi_reduction <add>, %8, %cst_7 [1] : vector<16x32xf32> to vector<16xf32>
    %10 = vector.shape_cast %9 : vector<16xf32> to vector<16x1xf32>
    %cst_8 = arith.constant 3.200000e+01 : f32
    %11 = vector.broadcast %cst_8 : f32 to vector<16x1xf32>
    %12 = arith.divf %10, %11 : vector<16x1xf32>
    %13 = arith.mulf %7, %7 : vector<16x1xf32>
    %14 = arith.subf %12, %13 : vector<16x1xf32>
    %cst_9 = arith.constant 0.000000e+00 : f32
    %15 = vector.broadcast %cst_9 : f32 to vector<16x1xf32>
    %16 = arith.maximumf %14, %15 : vector<16x1xf32>
    %17 = vector.broadcast %7 : vector<16x1xf32> to vector<16x32xf32>
    %18 = arith.subf %1, %17 : vector<16x32xf32>
    %cst_10 = arith.constant 9.99999996E-13 : f32
    %19 = vector.broadcast %cst_10 : f32 to vector<16x1xf32>
    %20 = arith.addf %16, %19 : vector<16x1xf32>
    %21 = math.rsqrt %20 : vector<16x1xf32>
    %22 = vector.broadcast %21 : vector<16x1xf32> to vector<16x32xf32>
    %23 = arith.mulf %18, %22 : vector<16x32xf32>
    %24 = vector.broadcast %2 : vector<1x32xf32> to vector<16x32xf32>
    %25 = arith.mulf %23, %24 : vector<16x32xf32>
    %26 = vector.broadcast %3 : vector<1x32xf32> to vector<16x32xf32>
    %27 = arith.addf %25, %26 : vector<16x32xf32>
    %28 = arith.truncf %27 : vector<16x32xf32> to vector<16x32xbf16>
    %c0_11 = arith.constant 0 : index
    %c0_12 = arith.constant 0 : index
    %29 = vector.load %arg2[%c0_11, %c0_12] : memref<160x128xbf16, #tpu.memory_space<vmem>>, vector<32x96xbf16>
    %cst_13 = arith.constant dense<0.000000e+00> : vector<16x96xf32>
    %30 = tpu.matmul %28, %29, %cst_13 {dimension_numbers = #tpu.dot_dimension_numbers<[1], [0], [0], [1], [0, 0, 1, 1], [], []>} : vector<16x32xbf16>, vector<32x96xbf16>, vector<16x96xf32> -> vector<16x96xf32>
    %c2 = arith.constant 2 : index
    %c0_14 = arith.constant 0 : index
    %31 = vector.load %arg3[%c2, %c0_14] : memref<8x128xf32, #tpu.memory_space<vmem>>, vector<1x96xf32>
    %32 = vector.broadcast %31 : vector<1x96xf32> to vector<16x96xf32>
    %33 = arith.addf %30, %32 : vector<16x96xf32>
    %34 = vector.extract_strided_slice %33 {offsets = [0, 0], sizes = [16, 32], strides = [1, 1]} : vector<16x96xf32> to vector<16x32xf32>
    %35 = vector.extract_strided_slice %34 {offsets = [0, 0], sizes = [16, 8], strides = [1, 1]} : vector<16x32xf32> to vector<16x8xf32>
    %36 = vector.extract_strided_slice %34 {offsets = [0, 8], sizes = [16, 8], strides = [1, 1]} : vector<16x32xf32> to vector<16x8xf32>
    %37 = vector.extract_strided_slice %34 {offsets = [0, 16], sizes = [16, 8], strides = [1, 1]} : vector<16x32xf32> to vector<16x8xf32>
    %38 = vector.extract_strided_slice %34 {offsets = [0, 24], sizes = [16, 8], strides = [1, 1]} : vector<16x32xf32> to vector<16x8xf32>
    %39 = tpu.concatenate %35, %36, %37, %38 in 0 : vector<16x8xf32>, vector<16x8xf32>, vector<16x8xf32>, vector<16x8xf32> -> vector<64x8xf32>
    %40 = arith.truncf %39 : vector<64x8xf32> to vector<64x8xbf16>
    %41 = vector.extract_strided_slice %33 {offsets = [0, 32], sizes = [16, 32], strides = [1, 1]} : vector<16x96xf32> to vector<16x32xf32>
    %42 = vector.extract_strided_slice %41 {offsets = [0, 0], sizes = [16, 8], strides = [1, 1]} : vector<16x32xf32> to vector<16x8xf32>
    %43 = vector.extract_strided_slice %41 {offsets = [0, 8], sizes = [16, 8], strides = [1, 1]} : vector<16x32xf32> to vector<16x8xf32>
    %44 = vector.extract_strided_slice %41 {offsets = [0, 16], sizes = [16, 8], strides = [1, 1]} : vector<16x32xf32> to vector<16x8xf32>
    %45 = vector.extract_strided_slice %41 {offsets = [0, 24], sizes = [16, 8], strides = [1, 1]} : vector<16x32xf32> to vector<16x8xf32>
    %46 = tpu.concatenate %42, %43, %44, %45 in 0 : vector<16x8xf32>, vector<16x8xf32>, vector<16x8xf32>, vector<16x8xf32> -> vector<64x8xf32>
    %47 = arith.truncf %46 : vector<64x8xf32> to vector<64x8xbf16>
    %48 = vector.extract_strided_slice %33 {offsets = [0, 64], sizes = [16, 32], strides = [1, 1]} : vector<16x96xf32> to vector<16x32xf32>
    %49 = vector.extract_strided_slice %48 {offsets = [0, 0], sizes = [16, 8], strides = [1, 1]} : vector<16x32xf32> to vector<16x8xf32>
    %50 = vector.extract_strided_slice %48 {offsets = [0, 8], sizes = [16, 8], strides = [1, 1]} : vector<16x32xf32> to vector<16x8xf32>
    %51 = vector.extract_strided_slice %48 {offsets = [0, 16], sizes = [16, 8], strides = [1, 1]} : vector<16x32xf32> to vector<16x8xf32>
    %52 = vector.extract_strided_slice %48 {offsets = [0, 24], sizes = [16, 8], strides = [1, 1]} : vector<16x32xf32> to vector<16x8xf32>
    %53 = tpu.concatenate %49, %50, %51, %52 in 0 : vector<16x8xf32>, vector<16x8xf32>, vector<16x8xf32>, vector<16x8xf32> -> vector<64x8xf32>
    %54 = arith.truncf %53 : vector<64x8xf32> to vector<64x8xbf16>
    %cst_15 = arith.constant dense<0.000000e+00> : vector<64x64xf32>
    %55 = tpu.matmul %40, %47, %cst_15 {dimension_numbers = #tpu.dot_dimension_numbers<[1], [1], [0], [0], [0, 0, 1, 0], [], []>} : vector<64x8xbf16>, vector<64x8xbf16>, vector<64x64xf32> -> vector<64x64xf32>
    %56 = arith.addf %55, %0 : vector<64x64xf32>
    %57 = math.exp %56 : vector<64x64xf32>
    %cst_16 = arith.constant dense<0.000000e+00> : vector<64xf32>
    %58 = vector.multi_reduction <add>, %57, %cst_16 [1] : vector<64x64xf32> to vector<64xf32>
    %59 = vector.shape_cast %58 : vector<64xf32> to vector<64x1xf32>
    %cst_17 = arith.constant 9.99999968E-21 : f32
    %60 = vector.broadcast %cst_17 : f32 to vector<64x1xf32>
    %61 = arith.maximumf %59, %60 : vector<64x1xf32>
    %62 = tpu.reciprocal %61 {approx = true} : vector<64x1xf32> -> vector<64x1xf32>
    %63 = vector.broadcast %62 : vector<64x1xf32> to vector<64x64xf32>
    %64 = arith.mulf %57, %63 : vector<64x64xf32>
    %65 = arith.truncf %64 : vector<64x64xf32> to vector<64x64xbf16>
    %cst_18 = arith.constant dense<0.000000e+00> : vector<64x8xf32>
    %66 = tpu.matmul %65, %54, %cst_18 {dimension_numbers = #tpu.dot_dimension_numbers<[1], [0], [0], [1], [0, 0, 1, 1], [], []>} : vector<64x64xbf16>, vector<64x8xbf16>, vector<64x8xf32> -> vector<64x8xf32>
    %67 = vector.extract_strided_slice %66 {offsets = [0, 0], sizes = [16, 8], strides = [1, 1]} : vector<64x8xf32> to vector<16x8xf32>
    %68 = vector.extract_strided_slice %66 {offsets = [16, 0], sizes = [16, 8], strides = [1, 1]} : vector<64x8xf32> to vector<16x8xf32>
    %69 = vector.extract_strided_slice %66 {offsets = [32, 0], sizes = [16, 8], strides = [1, 1]} : vector<64x8xf32> to vector<16x8xf32>
    %70 = vector.extract_strided_slice %66 {offsets = [48, 0], sizes = [16, 8], strides = [1, 1]} : vector<64x8xf32> to vector<16x8xf32>
    %71 = tpu.concatenate %67, %68, %69, %70 in 1 : vector<16x8xf32>, vector<16x8xf32>, vector<16x8xf32>, vector<16x8xf32> -> vector<16x32xf32>
    %72 = arith.truncf %71 : vector<16x32xf32> to vector<16x32xbf16>
    %c0_19 = arith.constant 0 : index
    %c96 = arith.constant 96 : index
    %73 = vector.load %arg2[%c0_19, %c96] : memref<160x128xbf16, #tpu.memory_space<vmem>>, vector<32x32xbf16>
    %cst_20 = arith.constant dense<0.000000e+00> : vector<16x32xf32>
    %74 = tpu.matmul %72, %73, %cst_20 {dimension_numbers = #tpu.dot_dimension_numbers<[1], [0], [0], [1], [0, 0, 1, 1], [], []>} : vector<16x32xbf16>, vector<32x32xbf16>, vector<16x32xf32> -> vector<16x32xf32>
    %c2_21 = arith.constant 2 : index
    %c96_22 = arith.constant 96 : index
    %75 = vector.load %arg3[%c2_21, %c96_22] : memref<8x128xf32, #tpu.memory_space<vmem>>, vector<1x32xf32>
    %76 = vector.broadcast %75 : vector<1x32xf32> to vector<16x32xf32>
    %77 = arith.addf %74, %76 : vector<16x32xf32>
    %78 = arith.addf %27, %77 : vector<16x32xf32>
    %c3 = arith.constant 3 : index
    %c0_23 = arith.constant 0 : index
    %79 = vector.load %arg3[%c3, %c0_23] : memref<8x128xf32, #tpu.memory_space<vmem>>, vector<1x32xf32>
    %c3_24 = arith.constant 3 : index
    %c32_25 = arith.constant 32 : index
    %80 = vector.load %arg3[%c3_24, %c32_25] : memref<8x128xf32, #tpu.memory_space<vmem>>, vector<1x32xf32>
    %cst_26 = arith.constant dense<0.000000e+00> : vector<16xf32>
    %81 = vector.multi_reduction <add>, %78, %cst_26 [1] : vector<16x32xf32> to vector<16xf32>
    %82 = vector.shape_cast %81 : vector<16xf32> to vector<16x1xf32>
    %cst_27 = arith.constant 3.200000e+01 : f32
    %83 = vector.broadcast %cst_27 : f32 to vector<16x1xf32>
    %84 = arith.divf %82, %83 : vector<16x1xf32>
    %85 = arith.mulf %78, %78 : vector<16x32xf32>
    %cst_28 = arith.constant dense<0.000000e+00> : vector<16xf32>
    %86 = vector.multi_reduction <add>, %85, %cst_28 [1] : vector<16x32xf32> to vector<16xf32>
    %87 = vector.shape_cast %86 : vector<16xf32> to vector<16x1xf32>
    %cst_29 = arith.constant 3.200000e+01 : f32
    %88 = vector.broadcast %cst_29 : f32 to vector<16x1xf32>
    %89 = arith.divf %87, %88 : vector<16x1xf32>
    %90 = arith.mulf %84, %84 : vector<16x1xf32>
    %91 = arith.subf %89, %90 : vector<16x1xf32>
    %cst_30 = arith.constant 0.000000e+00 : f32
    %92 = vector.broadcast %cst_30 : f32 to vector<16x1xf32>
    %93 = arith.maximumf %91, %92 : vector<16x1xf32>
    %94 = vector.broadcast %84 : vector<16x1xf32> to vector<16x32xf32>
    %95 = arith.subf %78, %94 : vector<16x32xf32>
    %cst_31 = arith.constant 9.99999996E-13 : f32
    %96 = vector.broadcast %cst_31 : f32 to vector<16x1xf32>
    %97 = arith.addf %93, %96 : vector<16x1xf32>
    %98 = math.rsqrt %97 : vector<16x1xf32>
    %99 = vector.broadcast %98 : vector<16x1xf32> to vector<16x32xf32>
    %100 = arith.mulf %95, %99 : vector<16x32xf32>
    %101 = vector.broadcast %79 : vector<1x32xf32> to vector<16x32xf32>
    %102 = arith.mulf %100, %101 : vector<16x32xf32>
    %103 = vector.broadcast %80 : vector<1x32xf32> to vector<16x32xf32>
    %104 = arith.addf %102, %103 : vector<16x32xf32>
    %105 = arith.truncf %104 : vector<16x32xf32> to vector<16x32xbf16>
    %c32_32 = arith.constant 32 : index
    %c0_33 = arith.constant 0 : index
    %106 = vector.load %arg2[%c32_32, %c0_33] : memref<160x128xbf16, #tpu.memory_space<vmem>>, vector<32x64xbf16>
    %cst_34 = arith.constant dense<0.000000e+00> : vector<16x64xf32>
    %107 = tpu.matmul %105, %106, %cst_34 {dimension_numbers = #tpu.dot_dimension_numbers<[1], [0], [0], [1], [0, 0, 1, 1], [], []>} : vector<16x32xbf16>, vector<32x64xbf16>, vector<16x64xf32> -> vector<16x64xf32>
    %c4 = arith.constant 4 : index
    %c0_35 = arith.constant 0 : index
    %108 = vector.load %arg3[%c4, %c0_35] : memref<8x128xf32, #tpu.memory_space<vmem>>, vector<1x64xf32>
    %109 = vector.broadcast %108 : vector<1x64xf32> to vector<16x64xf32>
    %110 = arith.addf %107, %109 : vector<16x64xf32>
    %cst_36 = arith.constant 5.000000e-01 : f32
    %111 = vector.broadcast %cst_36 : f32 to vector<16x64xf32>
    %112 = arith.mulf %111, %110 : vector<16x64xf32>
    %cst_37 = arith.constant 4.471500e-02 : f32
    %113 = vector.broadcast %cst_37 : f32 to vector<16x64xf32>
    %114 = arith.mulf %113, %110 : vector<16x64xf32>
    %115 = arith.mulf %114, %110 : vector<16x64xf32>
    %116 = arith.mulf %115, %110 : vector<16x64xf32>
    %117 = arith.addf %110, %116 : vector<16x64xf32>
    %cst_38 = arith.constant 0.797884583 : f32
    %118 = vector.broadcast %cst_38 : f32 to vector<16x64xf32>
    %119 = arith.mulf %118, %117 : vector<16x64xf32>
    %120 = math.tanh %119 : vector<16x64xf32>
    %cst_39 = arith.constant 1.000000e+00 : f32
    %121 = vector.broadcast %cst_39 : f32 to vector<16x64xf32>
    %122 = arith.addf %121, %120 : vector<16x64xf32>
    %123 = arith.mulf %112, %122 : vector<16x64xf32>
    %124 = arith.truncf %123 : vector<16x64xf32> to vector<16x64xbf16>
    %c32_40 = arith.constant 32 : index
    %c64 = arith.constant 64 : index
    %125 = vector.load %arg2[%c32_40, %c64] : memref<160x128xbf16, #tpu.memory_space<vmem>>, vector<32x64xbf16>
    %cst_41 = arith.constant dense<0.000000e+00> : vector<16x32xf32>
    %126 = tpu.matmul %124, %125, %cst_41 {dimension_numbers = #tpu.dot_dimension_numbers<[1], [1], [0], [0], [0, 0, 1, 0], [], []>} : vector<16x64xbf16>, vector<32x64xbf16>, vector<16x32xf32> -> vector<16x32xf32>
    %c4_42 = arith.constant 4 : index
    %c64_43 = arith.constant 64 : index
    %127 = vector.load %arg3[%c4_42, %c64_43] : memref<8x128xf32, #tpu.memory_space<vmem>>, vector<1x32xf32>
    %128 = vector.broadcast %127 : vector<1x32xf32> to vector<16x32xf32>
    %129 = arith.addf %126, %128 : vector<16x32xf32>
    %130 = arith.addf %104, %129 : vector<16x32xf32>
    %c3_44 = arith.constant 3 : index
    %c64_45 = arith.constant 64 : index
    %131 = vector.load %arg3[%c3_44, %c64_45] : memref<8x128xf32, #tpu.memory_space<vmem>>, vector<1x32xf32>
    %c3_46 = arith.constant 3 : index
    %c96_47 = arith.constant 96 : index
    %132 = vector.load %arg3[%c3_46, %c96_47] : memref<8x128xf32, #tpu.memory_space<vmem>>, vector<1x32xf32>
    %cst_48 = arith.constant dense<0.000000e+00> : vector<16xf32>
    %133 = vector.multi_reduction <add>, %130, %cst_48 [1] : vector<16x32xf32> to vector<16xf32>
    %134 = vector.shape_cast %133 : vector<16xf32> to vector<16x1xf32>
    %cst_49 = arith.constant 3.200000e+01 : f32
    %135 = vector.broadcast %cst_49 : f32 to vector<16x1xf32>
    %136 = arith.divf %134, %135 : vector<16x1xf32>
    %137 = arith.mulf %130, %130 : vector<16x32xf32>
    %cst_50 = arith.constant dense<0.000000e+00> : vector<16xf32>
    %138 = vector.multi_reduction <add>, %137, %cst_50 [1] : vector<16x32xf32> to vector<16xf32>
    %139 = vector.shape_cast %138 : vector<16xf32> to vector<16x1xf32>
    %cst_51 = arith.constant 3.200000e+01 : f32
    %140 = vector.broadcast %cst_51 : f32 to vector<16x1xf32>
    %141 = arith.divf %139, %140 : vector<16x1xf32>
    %142 = arith.mulf %136, %136 : vector<16x1xf32>
    %143 = arith.subf %141, %142 : vector<16x1xf32>
    %cst_52 = arith.constant 0.000000e+00 : f32
    %144 = vector.broadcast %cst_52 : f32 to vector<16x1xf32>
    %145 = arith.maximumf %143, %144 : vector<16x1xf32>
    %146 = vector.broadcast %136 : vector<16x1xf32> to vector<16x32xf32>
    %147 = arith.subf %130, %146 : vector<16x32xf32>
    %cst_53 = arith.constant 9.99999996E-13 : f32
    %148 = vector.broadcast %cst_53 : f32 to vector<16x1xf32>
    %149 = arith.addf %145, %148 : vector<16x1xf32>
    %150 = math.rsqrt %149 : vector<16x1xf32>
    %151 = vector.broadcast %150 : vector<16x1xf32> to vector<16x32xf32>
    %152 = arith.mulf %147, %151 : vector<16x32xf32>
    %153 = vector.broadcast %131 : vector<1x32xf32> to vector<16x32xf32>
    %154 = arith.mulf %152, %153 : vector<16x32xf32>
    %155 = vector.broadcast %132 : vector<1x32xf32> to vector<16x32xf32>
    %156 = arith.addf %154, %155 : vector<16x32xf32>
    %157 = arith.truncf %156 : vector<16x32xf32> to vector<16x32xbf16>
    %c64_54 = arith.constant 64 : index
    %c0_55 = arith.constant 0 : index
    %158 = vector.load %arg2[%c64_54, %c0_55] : memref<160x128xbf16, #tpu.memory_space<vmem>>, vector<32x96xbf16>
    %cst_56 = arith.constant dense<0.000000e+00> : vector<16x96xf32>
    %159 = tpu.matmul %157, %158, %cst_56 {dimension_numbers = #tpu.dot_dimension_numbers<[1], [0], [0], [1], [0, 0, 1, 1], [], []>} : vector<16x32xbf16>, vector<32x96xbf16>, vector<16x96xf32> -> vector<16x96xf32>
    %c5 = arith.constant 5 : index
    %c0_57 = arith.constant 0 : index
    %160 = vector.load %arg3[%c5, %c0_57] : memref<8x128xf32, #tpu.memory_space<vmem>>, vector<1x96xf32>
    %161 = vector.broadcast %160 : vector<1x96xf32> to vector<16x96xf32>
    %162 = arith.addf %159, %161 : vector<16x96xf32>
    %163 = vector.extract_strided_slice %162 {offsets = [0, 0], sizes = [16, 32], strides = [1, 1]} : vector<16x96xf32> to vector<16x32xf32>
    %164 = vector.extract_strided_slice %163 {offsets = [0, 0], sizes = [16, 8], strides = [1, 1]} : vector<16x32xf32> to vector<16x8xf32>
    %165 = vector.extract_strided_slice %163 {offsets = [0, 8], sizes = [16, 8], strides = [1, 1]} : vector<16x32xf32> to vector<16x8xf32>
    %166 = vector.extract_strided_slice %163 {offsets = [0, 16], sizes = [16, 8], strides = [1, 1]} : vector<16x32xf32> to vector<16x8xf32>
    %167 = vector.extract_strided_slice %163 {offsets = [0, 24], sizes = [16, 8], strides = [1, 1]} : vector<16x32xf32> to vector<16x8xf32>
    %168 = tpu.concatenate %164, %165, %166, %167 in 0 : vector<16x8xf32>, vector<16x8xf32>, vector<16x8xf32>, vector<16x8xf32> -> vector<64x8xf32>
    %169 = arith.truncf %168 : vector<64x8xf32> to vector<64x8xbf16>
    %170 = vector.extract_strided_slice %162 {offsets = [0, 32], sizes = [16, 32], strides = [1, 1]} : vector<16x96xf32> to vector<16x32xf32>
    %171 = vector.extract_strided_slice %170 {offsets = [0, 0], sizes = [16, 8], strides = [1, 1]} : vector<16x32xf32> to vector<16x8xf32>
    %172 = vector.extract_strided_slice %170 {offsets = [0, 8], sizes = [16, 8], strides = [1, 1]} : vector<16x32xf32> to vector<16x8xf32>
    %173 = vector.extract_strided_slice %170 {offsets = [0, 16], sizes = [16, 8], strides = [1, 1]} : vector<16x32xf32> to vector<16x8xf32>
    %174 = vector.extract_strided_slice %170 {offsets = [0, 24], sizes = [16, 8], strides = [1, 1]} : vector<16x32xf32> to vector<16x8xf32>
    %175 = tpu.concatenate %171, %172, %173, %174 in 0 : vector<16x8xf32>, vector<16x8xf32>, vector<16x8xf32>, vector<16x8xf32> -> vector<64x8xf32>
    %176 = arith.truncf %175 : vector<64x8xf32> to vector<64x8xbf16>
    %177 = vector.extract_strided_slice %162 {offsets = [0, 64], sizes = [16, 32], strides = [1, 1]} : vector<16x96xf32> to vector<16x32xf32>
    %178 = vector.extract_strided_slice %177 {offsets = [0, 0], sizes = [16, 8], strides = [1, 1]} : vector<16x32xf32> to vector<16x8xf32>
    %179 = vector.extract_strided_slice %177 {offsets = [0, 8], sizes = [16, 8], strides = [1, 1]} : vector<16x32xf32> to vector<16x8xf32>
    %180 = vector.extract_strided_slice %177 {offsets = [0, 16], sizes = [16, 8], strides = [1, 1]} : vector<16x32xf32> to vector<16x8xf32>
    %181 = vector.extract_strided_slice %177 {offsets = [0, 24], sizes = [16, 8], strides = [1, 1]} : vector<16x32xf32> to vector<16x8xf32>
    %182 = tpu.concatenate %178, %179, %180, %181 in 0 : vector<16x8xf32>, vector<16x8xf32>, vector<16x8xf32>, vector<16x8xf32> -> vector<64x8xf32>
    %183 = arith.truncf %182 : vector<64x8xf32> to vector<64x8xbf16>
    %cst_58 = arith.constant dense<0.000000e+00> : vector<64x64xf32>
    %184 = tpu.matmul %169, %176, %cst_58 {dimension_numbers = #tpu.dot_dimension_numbers<[1], [1], [0], [0], [0, 0, 1, 0], [], []>} : vector<64x8xbf16>, vector<64x8xbf16>, vector<64x64xf32> -> vector<64x64xf32>
    %185 = arith.addf %184, %0 : vector<64x64xf32>
    %186 = math.exp %185 : vector<64x64xf32>
    %cst_59 = arith.constant dense<0.000000e+00> : vector<64xf32>
    %187 = vector.multi_reduction <add>, %186, %cst_59 [1] : vector<64x64xf32> to vector<64xf32>
    %188 = vector.shape_cast %187 : vector<64xf32> to vector<64x1xf32>
    %cst_60 = arith.constant 9.99999968E-21 : f32
    %189 = vector.broadcast %cst_60 : f32 to vector<64x1xf32>
    %190 = arith.maximumf %188, %189 : vector<64x1xf32>
    %191 = tpu.reciprocal %190 {approx = true} : vector<64x1xf32> -> vector<64x1xf32>
    %192 = vector.broadcast %191 : vector<64x1xf32> to vector<64x64xf32>
    %193 = arith.mulf %186, %192 : vector<64x64xf32>
    %194 = arith.truncf %193 : vector<64x64xf32> to vector<64x64xbf16>
    %cst_61 = arith.constant dense<0.000000e+00> : vector<64x8xf32>
    %195 = tpu.matmul %194, %183, %cst_61 {dimension_numbers = #tpu.dot_dimension_numbers<[1], [0], [0], [1], [0, 0, 1, 1], [], []>} : vector<64x64xbf16>, vector<64x8xbf16>, vector<64x8xf32> -> vector<64x8xf32>
    %196 = vector.extract_strided_slice %195 {offsets = [0, 0], sizes = [16, 8], strides = [1, 1]} : vector<64x8xf32> to vector<16x8xf32>
    %197 = vector.extract_strided_slice %195 {offsets = [16, 0], sizes = [16, 8], strides = [1, 1]} : vector<64x8xf32> to vector<16x8xf32>
    %198 = vector.extract_strided_slice %195 {offsets = [32, 0], sizes = [16, 8], strides = [1, 1]} : vector<64x8xf32> to vector<16x8xf32>
    %199 = vector.extract_strided_slice %195 {offsets = [48, 0], sizes = [16, 8], strides = [1, 1]} : vector<64x8xf32> to vector<16x8xf32>
    %200 = tpu.concatenate %196, %197, %198, %199 in 1 : vector<16x8xf32>, vector<16x8xf32>, vector<16x8xf32>, vector<16x8xf32> -> vector<16x32xf32>
    %201 = arith.truncf %200 : vector<16x32xf32> to vector<16x32xbf16>
    %c64_62 = arith.constant 64 : index
    %c96_63 = arith.constant 96 : index
    %202 = vector.load %arg2[%c64_62, %c96_63] : memref<160x128xbf16, #tpu.memory_space<vmem>>, vector<32x32xbf16>
    %cst_64 = arith.constant dense<0.000000e+00> : vector<16x32xf32>
    %203 = tpu.matmul %201, %202, %cst_64 {dimension_numbers = #tpu.dot_dimension_numbers<[1], [0], [0], [1], [0, 0, 1, 1], [], []>} : vector<16x32xbf16>, vector<32x32xbf16>, vector<16x32xf32> -> vector<16x32xf32>
    %c5_65 = arith.constant 5 : index
    %c96_66 = arith.constant 96 : index
    %204 = vector.load %arg3[%c5_65, %c96_66] : memref<8x128xf32, #tpu.memory_space<vmem>>, vector<1x32xf32>
    %205 = vector.broadcast %204 : vector<1x32xf32> to vector<16x32xf32>
    %206 = arith.addf %203, %205 : vector<16x32xf32>
    %207 = arith.addf %156, %206 : vector<16x32xf32>
    %c6 = arith.constant 6 : index
    %c0_67 = arith.constant 0 : index
    %208 = vector.load %arg3[%c6, %c0_67] : memref<8x128xf32, #tpu.memory_space<vmem>>, vector<1x32xf32>
    %c6_68 = arith.constant 6 : index
    %c32_69 = arith.constant 32 : index
    %209 = vector.load %arg3[%c6_68, %c32_69] : memref<8x128xf32, #tpu.memory_space<vmem>>, vector<1x32xf32>
    %cst_70 = arith.constant dense<0.000000e+00> : vector<16xf32>
    %210 = vector.multi_reduction <add>, %207, %cst_70 [1] : vector<16x32xf32> to vector<16xf32>
    %211 = vector.shape_cast %210 : vector<16xf32> to vector<16x1xf32>
    %cst_71 = arith.constant 3.200000e+01 : f32
    %212 = vector.broadcast %cst_71 : f32 to vector<16x1xf32>
    %213 = arith.divf %211, %212 : vector<16x1xf32>
    %214 = arith.mulf %207, %207 : vector<16x32xf32>
    %cst_72 = arith.constant dense<0.000000e+00> : vector<16xf32>
    %215 = vector.multi_reduction <add>, %214, %cst_72 [1] : vector<16x32xf32> to vector<16xf32>
    %216 = vector.shape_cast %215 : vector<16xf32> to vector<16x1xf32>
    %cst_73 = arith.constant 3.200000e+01 : f32
    %217 = vector.broadcast %cst_73 : f32 to vector<16x1xf32>
    %218 = arith.divf %216, %217 : vector<16x1xf32>
    %219 = arith.mulf %213, %213 : vector<16x1xf32>
    %220 = arith.subf %218, %219 : vector<16x1xf32>
    %cst_74 = arith.constant 0.000000e+00 : f32
    %221 = vector.broadcast %cst_74 : f32 to vector<16x1xf32>
    %222 = arith.maximumf %220, %221 : vector<16x1xf32>
    %223 = vector.broadcast %213 : vector<16x1xf32> to vector<16x32xf32>
    %224 = arith.subf %207, %223 : vector<16x32xf32>
    %cst_75 = arith.constant 9.99999996E-13 : f32
    %225 = vector.broadcast %cst_75 : f32 to vector<16x1xf32>
    %226 = arith.addf %222, %225 : vector<16x1xf32>
    %227 = math.rsqrt %226 : vector<16x1xf32>
    %228 = vector.broadcast %227 : vector<16x1xf32> to vector<16x32xf32>
    %229 = arith.mulf %224, %228 : vector<16x32xf32>
    %230 = vector.broadcast %208 : vector<1x32xf32> to vector<16x32xf32>
    %231 = arith.mulf %229, %230 : vector<16x32xf32>
    %232 = vector.broadcast %209 : vector<1x32xf32> to vector<16x32xf32>
    %233 = arith.addf %231, %232 : vector<16x32xf32>
    %234 = arith.truncf %233 : vector<16x32xf32> to vector<16x32xbf16>
    %c96_76 = arith.constant 96 : index
    %c0_77 = arith.constant 0 : index
    %235 = vector.load %arg2[%c96_76, %c0_77] : memref<160x128xbf16, #tpu.memory_space<vmem>>, vector<32x64xbf16>
    %cst_78 = arith.constant dense<0.000000e+00> : vector<16x64xf32>
    %236 = tpu.matmul %234, %235, %cst_78 {dimension_numbers = #tpu.dot_dimension_numbers<[1], [0], [0], [1], [0, 0, 1, 1], [], []>} : vector<16x32xbf16>, vector<32x64xbf16>, vector<16x64xf32> -> vector<16x64xf32>
    %c7 = arith.constant 7 : index
    %c0_79 = arith.constant 0 : index
    %237 = vector.load %arg3[%c7, %c0_79] : memref<8x128xf32, #tpu.memory_space<vmem>>, vector<1x64xf32>
    %238 = vector.broadcast %237 : vector<1x64xf32> to vector<16x64xf32>
    %239 = arith.addf %236, %238 : vector<16x64xf32>
    %cst_80 = arith.constant 5.000000e-01 : f32
    %240 = vector.broadcast %cst_80 : f32 to vector<16x64xf32>
    %241 = arith.mulf %240, %239 : vector<16x64xf32>
    %cst_81 = arith.constant 4.471500e-02 : f32
    %242 = vector.broadcast %cst_81 : f32 to vector<16x64xf32>
    %243 = arith.mulf %242, %239 : vector<16x64xf32>
    %244 = arith.mulf %243, %239 : vector<16x64xf32>
    %245 = arith.mulf %244, %239 : vector<16x64xf32>
    %246 = arith.addf %239, %245 : vector<16x64xf32>
    %cst_82 = arith.constant 0.797884583 : f32
    %247 = vector.broadcast %cst_82 : f32 to vector<16x64xf32>
    %248 = arith.mulf %247, %246 : vector<16x64xf32>
    %249 = math.tanh %248 : vector<16x64xf32>
    %cst_83 = arith.constant 1.000000e+00 : f32
    %250 = vector.broadcast %cst_83 : f32 to vector<16x64xf32>
    %251 = arith.addf %250, %249 : vector<16x64xf32>
    %252 = arith.mulf %241, %251 : vector<16x64xf32>
    %253 = arith.truncf %252 : vector<16x64xf32> to vector<16x64xbf16>
    %c96_84 = arith.constant 96 : index
    %c64_85 = arith.constant 64 : index
    %254 = vector.load %arg2[%c96_84, %c64_85] : memref<160x128xbf16, #tpu.memory_space<vmem>>, vector<32x64xbf16>
    %cst_86 = arith.constant dense<0.000000e+00> : vector<16x32xf32>
    %255 = tpu.matmul %253, %254, %cst_86 {dimension_numbers = #tpu.dot_dimension_numbers<[1], [1], [0], [0], [0, 0, 1, 0], [], []>} : vector<16x64xbf16>, vector<32x64xbf16>, vector<16x32xf32> -> vector<16x32xf32>
    %c7_87 = arith.constant 7 : index
    %c64_88 = arith.constant 64 : index
    %256 = vector.load %arg3[%c7_87, %c64_88] : memref<8x128xf32, #tpu.memory_space<vmem>>, vector<1x32xf32>
    %257 = vector.broadcast %256 : vector<1x32xf32> to vector<16x32xf32>
    %258 = arith.addf %255, %257 : vector<16x32xf32>
    %259 = arith.addf %233, %258 : vector<16x32xf32>
    %c6_89 = arith.constant 6 : index
    %c64_90 = arith.constant 64 : index
    %260 = vector.load %arg3[%c6_89, %c64_90] : memref<8x128xf32, #tpu.memory_space<vmem>>, vector<1x32xf32>
    %c6_91 = arith.constant 6 : index
    %c96_92 = arith.constant 96 : index
    %261 = vector.load %arg3[%c6_91, %c96_92] : memref<8x128xf32, #tpu.memory_space<vmem>>, vector<1x32xf32>
    %cst_93 = arith.constant dense<0.000000e+00> : vector<16xf32>
    %262 = vector.multi_reduction <add>, %259, %cst_93 [1] : vector<16x32xf32> to vector<16xf32>
    %263 = vector.shape_cast %262 : vector<16xf32> to vector<16x1xf32>
    %cst_94 = arith.constant 3.200000e+01 : f32
    %264 = vector.broadcast %cst_94 : f32 to vector<16x1xf32>
    %265 = arith.divf %263, %264 : vector<16x1xf32>
    %266 = arith.mulf %259, %259 : vector<16x32xf32>
    %cst_95 = arith.constant dense<0.000000e+00> : vector<16xf32>
    %267 = vector.multi_reduction <add>, %266, %cst_95 [1] : vector<16x32xf32> to vector<16xf32>
    %268 = vector.shape_cast %267 : vector<16xf32> to vector<16x1xf32>
    %cst_96 = arith.constant 3.200000e+01 : f32
    %269 = vector.broadcast %cst_96 : f32 to vector<16x1xf32>
    %270 = arith.divf %268, %269 : vector<16x1xf32>
    %271 = arith.mulf %265, %265 : vector<16x1xf32>
    %272 = arith.subf %270, %271 : vector<16x1xf32>
    %cst_97 = arith.constant 0.000000e+00 : f32
    %273 = vector.broadcast %cst_97 : f32 to vector<16x1xf32>
    %274 = arith.maximumf %272, %273 : vector<16x1xf32>
    %275 = vector.broadcast %265 : vector<16x1xf32> to vector<16x32xf32>
    %276 = arith.subf %259, %275 : vector<16x32xf32>
    %cst_98 = arith.constant 9.99999996E-13 : f32
    %277 = vector.broadcast %cst_98 : f32 to vector<16x1xf32>
    %278 = arith.addf %274, %277 : vector<16x1xf32>
    %279 = math.rsqrt %278 : vector<16x1xf32>
    %280 = vector.broadcast %279 : vector<16x1xf32> to vector<16x32xf32>
    %281 = arith.mulf %276, %280 : vector<16x32xf32>
    %282 = vector.broadcast %260 : vector<1x32xf32> to vector<16x32xf32>
    %283 = arith.mulf %281, %282 : vector<16x32xf32>
    %284 = vector.broadcast %261 : vector<1x32xf32> to vector<16x32xf32>
    %285 = arith.addf %283, %284 : vector<16x32xf32>
    %c128 = arith.constant 128 : index
    %c0_99 = arith.constant 0 : index
    %286 = vector.load %arg2[%c128, %c0_99] : memref<160x128xbf16, #tpu.memory_space<vmem>>, vector<32x128xbf16>
    %287 = arith.truncf %285 : vector<16x32xf32> to vector<16x32xbf16>
    %288 = vector.extract_strided_slice %286 {offsets = [0, 64], sizes = [32, 32], strides = [1, 1]} : vector<32x128xbf16> to vector<32x32xbf16>
    %cst_100 = arith.constant dense<0.000000e+00> : vector<16x32xf32>
    %289 = tpu.matmul %287, %288, %cst_100 {dimension_numbers = #tpu.dot_dimension_numbers<[1], [0], [0], [1], [0, 0, 1, 1], [], []>} : vector<16x32xbf16>, vector<32x32xbf16>, vector<16x32xf32> -> vector<16x32xf32>
    %c0_101 = arith.constant 0 : index
    %c64_102 = arith.constant 64 : index
    %290 = vector.load %arg3[%c0_101, %c64_102] : memref<8x128xf32, #tpu.memory_space<vmem>>, vector<1x32xf32>
    %291 = vector.broadcast %290 : vector<1x32xf32> to vector<16x32xf32>
    %292 = arith.addf %289, %291 : vector<16x32xf32>
    %293 = math.tanh %292 : vector<16x32xf32>
    %294 = arith.truncf %293 : vector<16x32xf32> to vector<16x32xbf16>
    %cst_103 = arith.constant dense<0.000000e+00> : vector<16x128xf32>
    %295 = tpu.matmul %294, %286, %cst_103 {dimension_numbers = #tpu.dot_dimension_numbers<[1], [0], [0], [1], [0, 0, 1, 1], [], []>} : vector<16x32xbf16>, vector<32x128xbf16>, vector<16x128xf32> -> vector<16x128xf32>
    %c1 = arith.constant 1 : index
    %c0_104 = arith.constant 0 : index
    %296 = vector.load %arg3[%c1, %c0_104] : memref<8x128xf32, #tpu.memory_space<vmem>>, vector<1x128xf32>
    %297 = vector.broadcast %296 : vector<1x128xf32> to vector<16x128xf32>
    %298 = arith.addf %295, %297 : vector<16x128xf32>
    %cst_105 = arith.constant 0.000000e+00 : f32
    %299 = vector.broadcast %cst_105 : f32 to vector<16x128xf32>
    %300 = arith.subf %299, %298 : vector<16x128xf32>
    %301 = math.exp %300 : vector<16x128xf32>
    %cst_106 = arith.constant 1.000000e+00 : f32
    %302 = vector.broadcast %cst_106 : f32 to vector<16x128xf32>
    %303 = arith.addf %302, %301 : vector<16x128xf32>
    %cst_107 = arith.constant 1.000000e+00 : f32
    %304 = vector.broadcast %cst_107 : f32 to vector<16x128xf32>
    %305 = arith.divf %304, %303 : vector<16x128xf32>
    %c0_108 = arith.constant 0 : index
    %c0_109 = arith.constant 0 : index
    %306 = vector.load %arg4[%c0_108, %c0_109] : memref<16x128xf32, #tpu.memory_space<vmem>>, vector<16x128xf32>
    tpu.vector_store %arg4[%c0_108, %c0_109], %305 {strides = array<i32>} : memref<16x128xf32, #tpu.memory_space<vmem>>, vector<16x128xf32>,
    return
  }
}

</mosaic_0001>

<llo_original>
// kernel: tile.5
$region0: #{tile.5}
  %s0 = inlined_call_operand.vmem [shape: f32[2,8], index: 0, kind: input, shape index: {}]
  %s1 = inlined_call_operand.vmem [shape: f32[16], index: 1, kind: output, shape index: {}]
  $region1: #{tile.5} parent=0
    #allocation0 [shape = 'u8[4096]{0}', space=vmem, size = 0x1000, scoped, tag = 'scoped mem for output reshape']
    #allocation1 [shape = 'u8[4096]{0}', space=vmem, size = 0x1000, scoped, tag = 'scoped mem for input reshape']
    %s3 = ssub.s32 4, 1
    %v4 = vld [vmem:[%s0] sm:%s3]
    %5 = vst [vmem:[#allocation1] sm:%s3] %v4
    %v6 = vld [vmem:[#allocation1] sm:$0x1]
    %vm7 = vcmask 64512
    %8 = vst.msk [vmem:[#allocation0] sm:$0x1] %vm7, %v6
    %s9 = scalar_lea.vmem [#allocation1], 1
    %v10 = vld [vmem:[%s9] sm:$0x1]
    %11 = vrot.lane.b32.xlu0 %v10, 8
    %v12 = vpop.permute.xlu0 %11
    %vm13 = vcmask 130112
    %14 = vst.msk [vmem:[#allocation0] sm:$0x1] %vm13, %v12
    %s16 = ssub.s32 2, 1
    %v17 = vld [vmem:[#allocation0] sm:%s16]
    %s19 = ssub.s32 2, 1
    %20 = vst [vmem:[%s1] sm:%s19] %v17

// kernel: tile.6
$region0: #{tile.6}
  #allocation0 [shape = 's32[1]{0}', space=sflag, size = 0x4, scoped, tag = 'scoped memory for tile.6']
  %s0 = inlined_call_operand.vmem [shape: f32[16], index: 0, kind: input, shape index: {}]
  %s1 = inlined_call_operand.vmem [shape: f32[4,16], index: 1, kind: output, shape index: {}]
  // Predicated region
  $region2: #{tile.6} parent=0 // pred_check
    _
  $region3: #{tile.6} parent=0 // pred_check_branch
    %3 = sbr.rel (0) target = $region5
  $region4: #{tile.6} parent=0 // pred_region
    _
  $region5: #{tile.6} parent=0 // pred_fallthru
    _
  %v4 = vld [vmem:[%s0] ss:$0 sm:$0xff]
  %5 = vst [vmem:[%s1] sm:$0xf] %v4

// kernel: mul.8
$region0: #{mul.8}
  %s0 = inlined_call_operand.vmem [shape: f32[4,16], index: 0, kind: input, shape index: {}]
  %s1 = inlined_call_operand.vmem [shape: f32[64], index: 1, kind: output, shape index: {}]
  $region1: #{mul.8} parent=0
    #allocation0 [shape = 'u8[4096]{0}', space=vmem, size = 0x1000, scoped, tag = 'scoped mem for output reshape']
    #allocation1 [shape = 'u8[4096]{0}', space=vmem, size = 0x1000, scoped, tag = 'scoped mem for input reshape']
    %s3 = ssub.s32 16, 1
    %v4 = vld [vmem:[%s0] sm:%s3]
    %5 = vst [vmem:[#allocation1] sm:%s3] %v4
    %v6 = vld [vmem:[#allocation1] sm:$0x1]
    %vm7 = vcmask 130048
    %8 = vst.msk [vmem:[#allocation0] sm:$0x1] %vm7, %v6
    %s9 = scalar_lea.vmem [#allocation1], 3
    %v10 = vld [vmem:[%s9] sm:$0x1]
    %11 = vrot.lane.b32.xlu0 %v10, 48
    %v12 = vpop.permute.xlu0 %11
    %vm13 = vcmask 523648
    %14 = vst.msk [vmem:[#allocation0] sm:$0x1] %vm13, %v12
    %s15 = scalar_lea.vmem [#allocation1], 2
    %v16 = vld [vmem:[%s15] sm:$0x1]
    %17 = vrot.lane.b32.xlu0 %v16, 32
    %v18 = vpop.permute.xlu0 %17
    %vm19 = vcmask 392448
    %20 = vst.msk [vmem:[#allocation0] sm:$0x1] %vm19, %v18
    %s21 = scalar_lea.vmem [#allocation1], 1
    %v22 = vld [vmem:[%s21] sm:$0x1]
    %23 = vrot.lane.b32.xlu0 %v22, 16
    %v24 = vpop.permute.xlu0 %23
    %vm25 = vcmask 261248
    %26 = vst.msk [vmem:[#allocation0] sm:$0x1] %vm25, %v24
    %s28 = ssub.s32 2, 1
    %v29 = vld [vmem:[#allocation0] sm:%s28]
    %s31 = ssub.s32 2, 1
    %32 = vst [vmem:[%s1] sm:%s31] %v29

// kernel: aspect_prediction_forward.1
$region0: #{aspect_prediction_forward.1}
  #allocation0 [shape = 'u32[]', space=smem, size = 0x4, offset = 0x4, fixed_abs, tag = 'smem constant byte address 0x4 - core index']
  #allocation1 [shape = 'u32[72,128]{1,0:T(1,128)}', space=vmem, size = 0x9000, scoped, tag = 'internal scratch']
  %s0 = inlined_call_operand.vmem [shape: f32[16,32], index: 0, kind: input, shape index: {}]
  %s1 = inlined_call_operand.vmem [shape: f32[64,64], index: 1, kind: input, shape index: {}]
  %s2 = inlined_call_operand.vmem [shape: bf16[160,128], index: 2, kind: input, shape index: {}]
  %s3 = inlined_call_operand.vmem [shape: f32[8,128], index: 3, kind: input, shape index: {}]
  %s4 = inlined_call_operand.vmem [shape: f32[16,128], index: 4, kind: output, shape index: {}]
  %s5 = sld [smem:[#allocation0]]
  $region26: #{aspect_prediction_forward.1} parent=0
    _
  %s7 = ssub.s32 1, %s5
  %s8 = scalar_select 0, %s7, %s5
  // Predicated region
  $region2: #{aspect_prediction_forward.1} parent=0 // pred_check
    _
  $region3: #{aspect_prediction_forward.1} parent=0 // pred_check_branch
    %10 = sbr.rel (0) target = $region5
  $region4: #{aspect_prediction_forward.1} parent=0 // pred_region
    _
  $region5: #{aspect_prediction_forward.1} parent=0 // pred_fallthru
    _
  // Predicated region
  $region6: #{aspect_prediction_forward.1} parent=0 // pred_check
    _
  $region7: #{aspect_prediction_forward.1} parent=0 // pred_check_branch
    %12 = sbr.rel (0) target = $region9
  $region8: #{aspect_prediction_forward.1} parent=0 // pred_region
    _
  $region9: #{aspect_prediction_forward.1} parent=0 // pred_fallthru
    _
  // Predicated region
  $region10: #{aspect_prediction_forward.1} parent=0 // pred_check
    _
  $region11: #{aspect_prediction_forward.1} parent=0 // pred_check_branch
    %14 = sbr.rel (0) target = $region13
  $region12: #{aspect_prediction_forward.1} parent=0 // pred_region
    _
  $region13: #{aspect_prediction_forward.1} parent=0 // pred_fallthru
    _
  // Predicated region
  $region14: #{aspect_prediction_forward.1} parent=0 // pred_check
    _
  $region15: #{aspect_prediction_forward.1} parent=0 // pred_check_branch
    %16 = sbr.rel (0) target = $region17
  $region16: #{aspect_prediction_forward.1} parent=0 // pred_region
    _
  $region17: #{aspect_prediction_forward.1} parent=0 // pred_fallthru
    _
  %v18 = vld [vmem:[%s1] sm:$0xff]
  %v19 = vld [vmem:[%s1 + $0x8] sm:$0xff]
  %v20 = vld [vmem:[%s1 + $0x10] sm:$0xff]
  %v21 = vld [vmem:[%s1 + $0x18] sm:$0xff]
  %v22 = vld [vmem:[%s1 + $0x20] sm:$0xff]
  %v23 = vld [vmem:[%s1 + $0x28] sm:$0xff]
  %v24 = vld [vmem:[%s1 + $0x30] sm:$0xff]
  %v25 = vld [vmem:[%s1 + $0x38] sm:$0xff]
  %v26 = vld [vmem:[%s0] sm:$0xff]
  %v27 = vld [vmem:[%s0 + $0x8] sm:$0xff]
  %v28 = vld [vmem:[%s3] sm:$0x1]
  %vm29 = vcmask 261120
  %v30 = vsel %vm29, %v26, 0.0
  %31 = vadd.xlane.f32.xlu0 %v30
  %v32 = vpop.xlane.xlu0 %31
  %v33 = vsel %vm29, %v27, 0.0
  %34 = vadd.xlane.f32.xlu0 %v33
  %v35 = vpop.xlane.xlu0 %34
  %v36 = vrcp.pop 32.0
  %v37 = vmul.f32 32.0, %v36
  %v38 = vsub.f32 1.0, %v37
  %v39 = vmul.f32 %v36, %v38
  %v40 = vadd.f32 %v36, %v39
  %vm41 = vweird.f32 %v36
  %v42 = vsel %vm41, %v36, %v40
  %v43 = vmul.f32 %v32, %v42
  %v44 = vmul.f32 %v35, %v42
  %v45 = vmul.f32 %v26, %v26
  %v46 = vmul.f32 %v27, %v27
  %v47 = vsel %vm29, %v45, 0.0
  %48 = vadd.xlane.f32.xlu0 %v47
  %v49 = vpop.xlane.xlu0 %48
  %v50 = vsel %vm29, %v46, 0.0
  %51 = vadd.xlane.f32.xlu0 %v50
  %v52 = vpop.xlane.xlu0 %51
  %v53 = vmul.f32 %v49, %v42
  %v54 = vmul.f32 %v52, %v42
  %v55 = vmul.f32 %v43, %v43
  %v56 = vmul.f32 %v44, %v44
  %v57 = vsub.f32 %v53, %v55
  %v58 = vsub.f32 %v54, %v56
  %v59 = vmax.f32 %v57, 0.0
  %v60 = vmax.f32 %v58, 0.0
  %v61 = vsub.f32 %v26, %v43
  %v62 = vsub.f32 %v27, %v44
  %v63 = vadd.f32 %v59, 1e-12
  %v64 = vadd.f32 %v60, 1e-12
  %v65 = vrsqrt.pop %v63
  %v66 = vmul.f32 %v65, %v63
  %v67 = vmul.f32 %v66, %v65
  %v68 = vmul.f32 0.5, %v67
  %v69 = vsub.f32 1.5, %v68
  %v70 = vmul.f32 %v65, %v69
  %vm71 = vweird.f32 %v63
  %vm72 = vweird.f32 %v65
  %vm73 = vmor %vm71, %vm72
  %v74 = vsel %vm73, %v65, %v70
  %v75 = vrsqrt.pop %v64
  %v76 = vmul.f32 %v75, %v64
  %v77 = vmul.f32 %v76, %v75
  %v78 = vmul.f32 0.5, %v77
  %v79 = vsub.f32 1.5, %v78
  %v80 = vmul.f32 %v75, %v79
  %vm81 = vweird.f32 %v64
  %vm82 = vweird.f32 %v75
  %vm83 = vmor %vm81, %vm82
  %v84 = vsel %vm83, %v75, %v80
  %v85 = vmul.f32 %v61, %v74
  %v86 = vmul.f32 %v62, %v84
  %v87 = vperm.slane %v28, 0
  %v88 = vmul.f32 %v85, %v87
  %v89 = vmul.f32 %v86, %v87
  %91 = vrot.lane.b32.xlu0 %v87, 96
  %v92 = vpop.permute.xlu0 %91
  %v94 = vadd.f32 %v88, %v92
  %v95 = vadd.f32 %v89, %v92
  %v96 = vpack.c.bf16 %v95, %v94
  %v97 = vld [vmem:[%s2] sm:$0xf]
  %v98 = vld [vmem:[%s2 + $0x4] sm:$0xf]
  %v99 = vld [vmem:[%s2 + $0x8] sm:$0xf]
  %v100 = vld [vmem:[%s2 + $0xc] sm:$0xf]
  %v101 = vld [vmem:[%s3 + $0x2] sm:$0x1]
  %v102 = vperm.slane %v101, 0
  %v107 = vunpack.c.l.b16 %v97
  %v108 = vunpack.c.l.b16 %v98
  %v109 = vunpack.c.l.b16 %v99
  %v110 = vunpack.c.l.b16 %v100
  %v111 = vpack.c.b16 %v108, %v107
  %v112 = vpack.c.b16 %v110, %v109
  %v116 = vsel %vm29, %v96, 0
  %118 = vmatpush.bf16.msra.mxu0 0
  %119 = vmatpush.bf16.msra.mxu0 0
  %120 = vmatpush.bf16.msra.mxu0 0
  %121 = vmatpush.bf16.msra.mxu0 0
  %122 = vmatpush.bf16.msra.mxu0 0
  %123 = vmatpush.bf16.msra.mxu0 0
  %124 = vmatpush.bf16.msra.mxu0 %v112
  %125 = vmatpush.bf16.msra.mxu0 %v111
  %126 = vmatmul.bf16.gmra.mxu0 %v116
  %v127 = vpop.f32.mrf.mxu0
  %v128 = vadd.f32 %v102, %v127
  %v129 = vpop.f32.mrf.mxu0
  %v130 = vadd.f32 %v102, %v129
  %131 = vdwg.mxu0
  %134 = vrot.lane.b32.xlu0 %v128, 120
  %v135 = vpop.permute.xlu0 %134
  %136 = vrot.lane.b32.xlu0 %v130, 120
  %v137 = vpop.permute.xlu0 %136
  %140 = vrot.lane.b32.xlu0 %v128, 112
  %v141 = vpop.permute.xlu0 %140
  %142 = vrot.lane.b32.xlu0 %v130, 112
  %v143 = vpop.permute.xlu0 %142
  %146 = vrot.lane.b32.xlu0 %v128, 104
  %v147 = vpop.permute.xlu0 %146
  %148 = vrot.lane.b32.xlu0 %v130, 104
  %v149 = vpop.permute.xlu0 %148
  %v152 = vpack.c.bf16 %v130, %v128
  %v153 = vpack.c.bf16 %v137, %v135
  %v154 = vpack.c.bf16 %v143, %v141
  %v155 = vpack.c.bf16 %v149, %v147
  %160 = vrot.lane.b32.xlu0 %v152, 96
  %v161 = vpop.permute.xlu0 %160
  %162 = vrot.lane.b32.xlu0 %v153, 96
  %v163 = vpop.permute.xlu0 %162
  %164 = vrot.lane.b32.xlu0 %v154, 96
  %v165 = vpop.permute.xlu0 %164
  %166 = vrot.lane.b32.xlu0 %v155, 96
  %v167 = vpop.permute.xlu0 %166
  %vm168 = vcmask 64512
  %v170 = vsel %vm168, %v152, 0
  %v173 = vsel %vm168, %v153, 0
  %v176 = vsel %vm168, %v154, 0
  %v179 = vsel %vm168, %v155, 0
  %v182 = vsel %vm168, %v161, 0
  %v185 = vsel %vm168, %v163, 0
  %v188 = vsel %vm168, %v165, 0
  %v191 = vsel %vm168, %v167, 0
  %193 = vmatpush.bf16.xpose.msra.mxu0 0
  %194 = vmatpush.bf16.xpose.msra.mxu0 0
  %195 = vmatpush.bf16.xpose.msra.mxu0 0
  %196 = vmatpush.bf16.xpose.msra.mxu0 0
  %197 = vmatpush.bf16.xpose.msra.mxu0 %v191
  %198 = vmatpush.bf16.xpose.msra.mxu0 %v188
  %199 = vmatpush.bf16.xpose.msra.mxu0 %v185
  %200 = vmatpush.bf16.xpose.msra.mxu0 %v182
  %201 = vmatmul.bf16.gmra.mxu0 %v170
  %v202 = vpop.f32.mrf.mxu0
  %v203 = vadd.f32 %v18, %v202
  %v204 = vpop.f32.mrf.mxu0
  %v205 = vadd.f32 %v19, %v204
  %206 = vmatmul.bf16.gmra.mxu0 %v173
  %v207 = vpop.f32.mrf.mxu0
  %v208 = vadd.f32 %v20, %v207
  %v209 = vpop.f32.mrf.mxu0
  %v210 = vadd.f32 %v21, %v209
  %211 = vmatmul.bf16.gmra.mxu0 %v176
  %v212 = vpop.f32.mrf.mxu0
  %v213 = vadd.f32 %v22, %v212
  %v214 = vpop.f32.mrf.mxu0
  %v215 = vadd.f32 %v23, %v214
  %216 = vmatmul.bf16.gmra.mxu0 %v179
  %v217 = vpop.f32.mrf.mxu0
  %v218 = vadd.f32 %v24, %v217
  %v219 = vpop.f32.mrf.mxu0
  %v220 = vadd.f32 %v25, %v219
  %221 = vdwg.mxu0
  %v222 = vmul.f32 %v203, 1.442695
  %v223 = vpow.pop %v222
  %v224 = vmul.f32 %v205, 1.442695
  %v225 = vpow.pop %v224
  %v226 = vmul.f32 %v208, 1.442695
  %v227 = vpow.pop %v226
  %v228 = vmul.f32 %v210, 1.442695
  %v229 = vpow.pop %v228
  %v230 = vmul.f32 %v213, 1.442695
  %v231 = vpow.pop %v230
  %v232 = vmul.f32 %v215, 1.442695
  %v233 = vpow.pop %v232
  %v234 = vmul.f32 %v218, 1.442695
  %v235 = vpow.pop %v234
  %v236 = vmul.f32 %v220, 1.442695
  %v237 = vpow.pop %v236
  %vm238 = vcmask 523264
  %v239 = vsel %vm238, %v223, 0.0
  %240 = vadd.xlane.f32.xlu0 %v239
  %v241 = vpop.xlane.xlu0 %240
  %v242 = vsel %vm238, %v225, 0.0
  %243 = vadd.xlane.f32.xlu0 %v242
  %v244 = vpop.xlane.xlu0 %243
  %v245 = vsel %vm238, %v227, 0.0
  %246 = vadd.xlane.f32.xlu0 %v245
  %v247 = vpop.xlane.xlu0 %246
  %v248 = vsel %vm238, %v229, 0.0
  %249 = vadd.xlane.f32.xlu0 %v248
  %v250 = vpop.xlane.xlu0 %249
  %v251 = vsel %vm238, %v231, 0.0
  %252 = vadd.xlane.f32.xlu0 %v251
  %v253 = vpop.xlane.xlu0 %252
  %v254 = vsel %vm238, %v233, 0.0
  %255 = vadd.xlane.f32.xlu0 %v254
  %v256 = vpop.xlane.xlu0 %255
  %v257 = vsel %vm238, %v235, 0.0
  %258 = vadd.xlane.f32.xlu0 %v257
  %v259 = vpop.xlane.xlu0 %258
  %v260 = vsel %vm238, %v237, 0.0
  %261 = vadd.xlane.f32.xlu0 %v260
  %v262 = vpop.xlane.xlu0 %261
  %v263 = vmax.f32 %v241, 1e-20
  %v264 = vmax.f32 %v244, 1e-20
  %v265 = vmax.f32 %v247, 1e-20
  %v266 = vmax.f32 %v250, 1e-20
  %v267 = vmax.f32 %v253, 1e-20
  %v268 = vmax.f32 %v256, 1e-20
  %v269 = vmax.f32 %v259, 1e-20
  %v270 = vmax.f32 %v262, 1e-20
  %v271 = vrcp.pop %v263
  %v272 = vrcp.pop %v264
  %v273 = vrcp.pop %v265
  %v274 = vrcp.pop %v266
  %v275 = vrcp.pop %v267
  %v276 = vrcp.pop %v268
  %v277 = vrcp.pop %v269
  %v278 = vrcp.pop %v270
  %v279 = vmul.f32 %v223, %v271
  %v280 = vmul.f32 %v225, %v272
  %v281 = vmul.f32 %v227, %v273
  %v282 = vmul.f32 %v229, %v274
  %v283 = vmul.f32 %v231, %v275
  %v284 = vmul.f32 %v233, %v276
  %v285 = vmul.f32 %v235, %v277
  %v286 = vmul.f32 %v237, %v278
  %v287 = vpack.c.bf16 %v280, %v279
  %v288 = vpack.c.bf16 %v282, %v281
  %v289 = vpack.c.bf16 %v284, %v283
  %v290 = vpack.c.bf16 %v286, %v285
  %291 = vrot.lane.b32.xlu0 %v152, 64
  %v292 = vpop.permute.xlu0 %291
  %293 = vrot.lane.b32.xlu0 %v153, 64
  %v294 = vpop.permute.xlu0 %293
  %295 = vrot.lane.b32.xlu0 %v154, 64
  %v296 = vpop.permute.xlu0 %295
  %297 = vrot.lane.b32.xlu0 %v155, 64
  %v298 = vpop.permute.xlu0 %297
  %v304 = vsel %vm238, %v287, 0
  %v307 = vsel %vm238, %v288, 0
  %v310 = vsel %vm238, %v289, 0
  %v313 = vsel %vm238, %v290, 0
  %315 = vmatpush.bf16.msra.mxu0 0
  %316 = vmatpush.bf16.msra.mxu0 0
  %317 = vmatpush.bf16.msra.mxu0 0
  %318 = vmatpush.bf16.msra.mxu0 0
  %319 = vmatpush.bf16.msra.mxu0 %v298
  %320 = vmatpush.bf16.msra.mxu0 %v296
  %321 = vmatpush.bf16.msra.mxu0 %v294
  %322 = vmatpush.bf16.msra.mxu0 %v292
  %323 = vmatmul.bf16.gmra.mxu0 %v304
  %v324 = vpop.f32.mrf.mxu0
  %v325 = vadd.f32 0.0, %v324
  %v326 = vpop.f32.mrf.mxu0
  %v327 = vadd.f32 0.0, %v326
  %328 = vmatmul.bf16.gmra.mxu0 %v307
  %v329 = vpop.f32.mrf.mxu0
  %v330 = vadd.f32 0.0, %v329
  %v331 = vpop.f32.mrf.mxu0
  %v332 = vadd.f32 0.0, %v331
  %333 = vmatmul.bf16.gmra.mxu0 %v310
  %v334 = vpop.f32.mrf.mxu0
  %v335 = vadd.f32 0.0, %v334
  %v336 = vpop.f32.mrf.mxu0
  %v337 = vadd.f32 0.0, %v336
  %338 = vmatmul.bf16.gmra.mxu0 %v313
  %v339 = vpop.f32.mrf.mxu0
  %v340 = vadd.f32 0.0, %v339
  %v341 = vpop.f32.mrf.mxu0
  %v342 = vadd.f32 0.0, %v341
  %343 = vdwg.mxu0
  %346 = vrot.lane.b32.xlu0 %v330, 8
  %v347 = vpop.permute.xlu0 %346
  %348 = vrot.lane.b32.xlu0 %v332, 8
  %v349 = vpop.permute.xlu0 %348
  %354 = vrot.lane.b32.xlu0 %v335, 16
  %v355 = vpop.permute.xlu0 %354
  %356 = vrot.lane.b32.xlu0 %v337, 16
  %v357 = vpop.permute.xlu0 %356
  %362 = vrot.lane.b32.xlu0 %v340, 24
  %v363 = vpop.permute.xlu0 %362
  %364 = vrot.lane.b32.xlu0 %v342, 24
  %v365 = vpop.permute.xlu0 %364
  %v368 = vsel %vm168, %v325, %v347
  %v369 = vsel %vm168, %v327, %v349
  %vm370 = vcmask 130048
  %v371 = vsel %vm370, %v368, %v355
  %v372 = vsel %vm370, %v369, %v357
  %vm373 = vcmask 195584
  %v374 = vsel %vm373, %v371, %v363
  %v375 = vsel %vm373, %v372, %v365
  %v376 = vpack.c.bf16 %v375, %v374
  %377 = vrot.lane.b32.xlu0 %v111, 32
  %v378 = vpop.permute.xlu0 %377
  %379 = vrot.lane.b32.xlu0 %v112, 32
  %v380 = vpop.permute.xlu0 %379
  %384 = vrot.lane.b32.xlu0 %v102, 32
  %v385 = vpop.permute.xlu0 %384
  %v388 = vsel %vm29, %v376, 0
  %390 = vmatpush.bf16.msra.mxu0 0
  %391 = vmatpush.bf16.msra.mxu0 0
  %392 = vmatpush.bf16.msra.mxu0 0
  %393 = vmatpush.bf16.msra.mxu0 0
  %394 = vmatpush.bf16.msra.mxu0 0
  %395 = vmatpush.bf16.msra.mxu0 0
  %396 = vmatpush.bf16.msra.mxu0 %v380
  %397 = vmatpush.bf16.msra.mxu0 %v378
  %398 = vmatmul.bf16.gmra.mxu0 %v388
  %v399 = vpop.f32.mrf.mxu0
  %v400 = vadd.f32 %v385, %v399
  %v401 = vpop.f32.mrf.mxu0
  %v402 = vadd.f32 %v385, %v401
  %403 = vdwg.mxu0
  %v404 = vadd.f32 %v94, %v400
  %v405 = vadd.f32 %v95, %v402
  %v406 = vld [vmem:[%s3 + $0x3] sm:$0x1]
  %v407 = vsel %vm29, %v404, 0.0
  %408 = vadd.xlane.f32.xlu0 %v407
  %v409 = vpop.xlane.xlu0 %408
  %v410 = vsel %vm29, %v405, 0.0
  %411 = vadd.xlane.f32.xlu0 %v410
  %v412 = vpop.xlane.xlu0 %411
  %v413 = vmul.f32 %v409, %v42
  %v414 = vmul.f32 %v412, %v42
  %v415 = vmul.f32 %v404, %v404
  %v416 = vmul.f32 %v405, %v405
  %v417 = vsel %vm29, %v415, 0.0
  %418 = vadd.xlane.f32.xlu0 %v417
  %v419 = vpop.xlane.xlu0 %418
  %v420 = vsel %vm29, %v416, 0.0
  %421 = vadd.xlane.f32.xlu0 %v420
  %v422 = vpop.xlane.xlu0 %421
  %v423 = vmul.f32 %v419, %v42
  %v424 = vmul.f32 %v422, %v42
  %v425 = vmul.f32 %v413, %v413
  %v426 = vmul.f32 %v414, %v414
  %v427 = vsub.f32 %v423, %v425
  %v428 = vsub.f32 %v424, %v426
  %v429 = vmax.f32 %v427, 0.0
  %v430 = vmax.f32 %v428, 0.0
  %v431 = vsub.f32 %v404, %v413
  %v432 = vsub.f32 %v405, %v414
  %v433 = vadd.f32 %v429, 1e-12
  %v434 = vadd.f32 %v430, 1e-12
  %v435 = vrsqrt.pop %v433
  %v436 = vmul.f32 %v435, %v433
  %v437 = vmul.f32 %v436, %v435
  %v438 = vmul.f32 0.5, %v437
  %v439 = vsub.f32 1.5, %v438
  %v440 = vmul.f32 %v435, %v439
  %vm441 = vweird.f32 %v433
  %vm442 = vweird.f32 %v435
  %vm443 = vmor %vm441, %vm442
  %v444 = vsel %vm443, %v435, %v440
  %v445 = vrsqrt.pop %v434
  %v446 = vmul.f32 %v445, %v434
  %v447 = vmul.f32 %v446, %v445
  %v448 = vmul.f32 0.5, %v447
  %v449 = vsub.f32 1.5, %v448
  %v450 = vmul.f32 %v445, %v449
  %vm451 = vweird.f32 %v434
  %vm452 = vweird.f32 %v445
  %vm453 = vmor %vm451, %vm452
  %v454 = vsel %vm453, %v445, %v450
  %v455 = vmul.f32 %v431, %v444
  %v456 = vmul.f32 %v432, %v454
  %v457 = vperm.slane %v406, 0
  %v458 = vmul.f32 %v455, %v457
  %v459 = vmul.f32 %v456, %v457
  %461 = vrot.lane.b32.xlu0 %v457, 96
  %v462 = vpop.permute.xlu0 %461
  %v464 = vadd.f32 %v458, %v462
  %v465 = vadd.f32 %v459, %v462
  %v466 = vpack.c.bf16 %v465, %v464
  %v467 = vld [vmem:[%s2 + $0x10] sm:$0xf]
  %v468 = vld [vmem:[%s2 + $0x14] sm:$0xf]
  %v469 = vld [vmem:[%s2 + $0x18] sm:$0xf]
  %v470 = vld [vmem:[%s2 + $0x1c] sm:$0xf]
  %v471 = vld [vmem:[%s3 + $0x4] sm:$0x1]
  %v472 = vperm.slane %v471, 0
  %v477 = vunpack.c.l.b16 %v467
  %v478 = vunpack.c.l.b16 %v468
  %v479 = vunpack.c.l.b16 %v469
  %v480 = vunpack.c.l.b16 %v470
  %v481 = vpack.c.b16 %v478, %v477
  %v482 = vpack.c.b16 %v480, %v479
  %v486 = vsel %vm29, %v466, 0
  %488 = vmatpush.bf16.msra.mxu0 0
  %489 = vmatpush.bf16.msra.mxu0 0
  %490 = vmatpush.bf16.msra.mxu0 0
  %491 = vmatpush.bf16.msra.mxu0 0
  %492 = vmatpush.bf16.msra.mxu0 0
  %493 = vmatpush.bf16.msra.mxu0 0
  %494 = vmatpush.bf16.msra.mxu0 %v482
  %495 = vmatpush.bf16.msra.mxu0 %v481
  %496 = vmatmul.bf16.gmra.mxu0 %v486
  %v497 = vpop.f32.mrf.mxu0
  %v498 = vadd.f32 %v472, %v497
  %v499 = vpop.f32.mrf.mxu0
  %v500 = vadd.f32 %v472, %v499
  %501 = vdwg.mxu0
  %v502 = vmul.f32 %v498, 0.5
  %v503 = vmul.f32 %v500, 0.5
  %v504 = vmul.f32 %v498, 0.044715
  %v505 = vmul.f32 %v500, 0.044715
  %v506 = vmul.f32 %v504, %v498
  %v507 = vmul.f32 %v505, %v500
  %v508 = vmul.f32 %v506, %v498
  %v509 = vmul.f32 %v507, %v500
  %v510 = vadd.f32 %v498, %v508
  %v511 = vadd.f32 %v500, %v509
  %v512 = vmul.f32 %v510, 0.7978846
  %v513 = vmul.f32 %v511, 0.7978846
  %v514 = vtanh.pop %v512
  %v515 = vtanh.pop %v513
  %v516 = vadd.f32 %v514, 1.0
  %v517 = vadd.f32 %v515, 1.0
  %v518 = vmul.f32 %v502, %v516
  %v519 = vmul.f32 %v503, %v517
  %v520 = vpack.c.bf16 %v519, %v518
  %521 = vrot.lane.b32.xlu0 %v481, 64
  %v522 = vpop.permute.xlu0 %521
  %523 = vrot.lane.b32.xlu0 %v482, 64
  %v524 = vpop.permute.xlu0 %523
  %526 = vrot.lane.b32.xlu0 %v472, 64
  %v527 = vpop.permute.xlu0 %526
  %v530 = vsel %vm238, %v520, 0
  %v533 = vsel %vm238, %v522, 0
  %v536 = vsel %vm238, %v524, 0
  %538 = vmatpush.bf16.xpose.msra.mxu0 0
  %539 = vmatpush.bf16.xpose.msra.mxu0 0
  %540 = vmatpush.bf16.xpose.msra.mxu0 0
  %541 = vmatpush.bf16.xpose.msra.mxu0 0
  %542 = vmatpush.bf16.xpose.msra.mxu0 0
  %543 = vmatpush.bf16.xpose.msra.mxu0 0
  %544 = vmatpush.bf16.xpose.msra.mxu0 %v536
  %545 = vmatpush.bf16.xpose.msra.mxu0 %v533
  %546 = vmatmul.bf16.gmra.mxu0 %v530
  %v547 = vpop.f32.mrf.mxu0
  %v548 = vadd.f32 %v527, %v547
  %v549 = vpop.f32.mrf.mxu0
  %v550 = vadd.f32 %v527, %v549
  %551 = vdwg.mxu0
  %v552 = vadd.f32 %v464, %v548
  %v553 = vadd.f32 %v465, %v550
  %v554 = vsel %vm29, %v552, 0.0
  %555 = vadd.xlane.f32.xlu0 %v554
  %v556 = vpop.xlane.xlu0 %555
  %v557 = vsel %vm29, %v553, 0.0
  %558 = vadd.xlane.f32.xlu0 %v557
  %v559 = vpop.xlane.xlu0 %558
  %v560 = vmul.f32 %v556, %v42
  %v561 = vmul.f32 %v559, %v42
  %v562 = vmul.f32 %v552, %v552
  %v563 = vmul.f32 %v553, %v553
  %v564 = vsel %vm29, %v562, 0.0
  %565 = vadd.xlane.f32.xlu0 %v564
  %v566 = vpop.xlane.xlu0 %565
  %v567 = vsel %vm29, %v563, 0.0
  %568 = vadd.xlane.f32.xlu0 %v567
  %v569 = vpop.xlane.xlu0 %568
  %v570 = vmul.f32 %v566, %v42
  %v571 = vmul.f32 %v569, %v42
  %v572 = vmul.f32 %v560, %v560
  %v573 = vmul.f32 %v561, %v561
  %v574 = vsub.f32 %v570, %v572
  %v575 = vsub.f32 %v571, %v573
  %v576 = vmax.f32 %v574, 0.0
  %v577 = vmax.f32 %v575, 0.0
  %v578 = vsub.f32 %v552, %v560
  %v579 = vsub.f32 %v553, %v561
  %v580 = vadd.f32 %v576, 1e-12
  %v581 = vadd.f32 %v577, 1e-12
  %v582 = vrsqrt.pop %v580
  %v583 = vmul.f32 %v582, %v580
  %v584 = vmul.f32 %v583, %v582
  %v585 = vmul.f32 0.5, %v584
  %v586 = vsub.f32 1.5, %v585
  %v587 = vmul.f32 %v582, %v586
  %vm588 = vweird.f32 %v580
  %vm589 = vweird.f32 %v582
  %vm590 = vmor %vm588, %vm589
  %v591 = vsel %vm590, %v582, %v587
  %v592 = vrsqrt.pop %v581
  %v593 = vmul.f32 %v592, %v581
  %v594 = vmul.f32 %v593, %v592
  %v595 = vmul.f32 0.5, %v594
  %v596 = vsub.f32 1.5, %v595
  %v597 = vmul.f32 %v592, %v596
  %vm598 = vweird.f32 %v581
  %vm599 = vweird.f32 %v592
  %vm600 = vmor %vm598, %vm599
  %v601 = vsel %vm600, %v592, %v597
  %v602 = vmul.f32 %v578, %v591
  %v603 = vmul.f32 %v579, %v601
  %604 = vrot.lane.b32.xlu0 %v457, 64
  %v605 = vpop.permute.xlu0 %604
  %v607 = vmul.f32 %v602, %v605
  %v608 = vmul.f32 %v603, %v605
  %609 = vrot.lane.b32.xlu0 %v457, 32
  %v610 = vpop.permute.xlu0 %609
  %v612 = vadd.f32 %v607, %v610
  %v613 = vadd.f32 %v608, %v610
  %v614 = vpack.c.bf16 %v613, %v612
  %v615 = vld [vmem:[%s2 + $0x20] sm:$0xf]
  %v616 = vld [vmem:[%s2 + $0x24] sm:$0xf]
  %v617 = vld [vmem:[%s2 + $0x28] sm:$0xf]
  %v618 = vld [vmem:[%s2 + $0x2c] sm:$0xf]
  %v619 = vld [vmem:[%s3 + $0x5] sm:$0x1]
  %v620 = vperm.slane %v619, 0
  %v625 = vunpack.c.l.b16 %v615
  %v626 = vunpack.c.l.b16 %v616
  %v627 = vunpack.c.l.b16 %v617
  %v628 = vunpack.c.l.b16 %v618
  %v629 = vpack.c.b16 %v626, %v625
  %v630 = vpack.c.b16 %v628, %v627
  %v634 = vsel %vm29, %v614, 0
  %636 = vmatpush.bf16.msra.mxu0 0
  %637 = vmatpush.bf16.msra.mxu0 0
  %638 = vmatpush.bf16.msra.mxu0 0
  %639 = vmatpush.bf16.msra.mxu0 0
  %640 = vmatpush.bf16.msra.mxu0 0
  %641 = vmatpush.bf16.msra.mxu0 0
  %642 = vmatpush.bf16.msra.mxu0 %v630
  %643 = vmatpush.bf16.msra.mxu0 %v629
  %644 = vmatmul.bf16.gmra.mxu0 %v634
  %v645 = vpop.f32.mrf.mxu0
  %v646 = vadd.f32 %v620, %v645
  %v647 = vpop.f32.mrf.mxu0
  %v648 = vadd.f32 %v620, %v647
  %649 = vdwg.mxu0
  %652 = vrot.lane.b32.xlu0 %v646, 120
  %v653 = vpop.permute.xlu0 %652
  %654 = vrot.lane.b32.xlu0 %v648, 120
  %v655 = vpop.permute.xlu0 %654
  %658 = vrot.lane.b32.xlu0 %v646, 112
  %v659 = vpop.permute.xlu0 %658
  %660 = vrot.lane.b32.xlu0 %v648, 112
  %v661 = vpop.permute.xlu0 %660
  %664 = vrot.lane.b32.xlu0 %v646, 104
  %v665 = vpop.permute.xlu0 %664
  %666 = vrot.lane.b32.xlu0 %v648, 104
  %v667 = vpop.permute.xlu0 %666
  %v670 = vpack.c.bf16 %v648, %v646
  %v671 = vpack.c.bf16 %v655, %v653
  %v672 = vpack.c.bf16 %v661, %v659
  %v673 = vpack.c.bf16 %v667, %v665
  %678 = vrot.lane.b32.xlu0 %v670, 96
  %v679 = vpop.permute.xlu0 %678
  %680 = vrot.lane.b32.xlu0 %v671, 96
  %v681 = vpop.permute.xlu0 %680
  %682 = vrot.lane.b32.xlu0 %v672, 96
  %v683 = vpop.permute.xlu0 %682
  %684 = vrot.lane.b32.xlu0 %v673, 96
  %v685 = vpop.permute.xlu0 %684
  %v687 = vsel %vm168, %v670, 0
  %v690 = vsel %vm168, %v671, 0
  %v693 = vsel %vm168, %v672, 0
  %v696 = vsel %vm168, %v673, 0
  %v699 = vsel %vm168, %v679, 0
  %v702 = vsel %vm168, %v681, 0
  %v705 = vsel %vm168, %v683, 0
  %v708 = vsel %vm168, %v685, 0
  %710 = vmatpush.bf16.xpose.msra.mxu0 0
  %711 = vmatpush.bf16.xpose.msra.mxu0 0
  %712 = vmatpush.bf16.xpose.msra.mxu0 0
  %713 = vmatpush.bf16.xpose.msra.mxu0 0
  %714 = vmatpush.bf16.xpose.msra.mxu0 %v708
  %715 = vmatpush.bf16.xpose.msra.mxu0 %v705
  %716 = vmatpush.bf16.xpose.msra.mxu0 %v702
  %717 = vmatpush.bf16.xpose.msra.mxu0 %v699
  %718 = vmatmul.bf16.gmra.mxu0 %v687
  %v719 = vpop.f32.mrf.mxu0
  %v720 = vadd.f32 %v18, %v719
  %v721 = vpop.f32.mrf.mxu0
  %v722 = vadd.f32 %v19, %v721
  %723 = vmatmul.bf16.gmra.mxu0 %v690
  %v724 = vpop.f32.mrf.mxu0
  %v725 = vadd.f32 %v20, %v724
  %v726 = vpop.f32.mrf.mxu0
  %v727 = vadd.f32 %v21, %v726
  %728 = vmatmul.bf16.gmra.mxu0 %v693
  %v729 = vpop.f32.mrf.mxu0
  %v730 = vadd.f32 %v22, %v729
  %v731 = vpop.f32.mrf.mxu0
  %v732 = vadd.f32 %v23, %v731
  %733 = vmatmul.bf16.gmra.mxu0 %v696
  %v734 = vpop.f32.mrf.mxu0
  %v735 = vadd.f32 %v24, %v734
  %v736 = vpop.f32.mrf.mxu0
  %v737 = vadd.f32 %v25, %v736
  %738 = vdwg.mxu0
  %v739 = vmul.f32 %v720, 1.442695
  %v740 = vpow.pop %v739
  %v741 = vmul.f32 %v722, 1.442695
  %v742 = vpow.pop %v741
  %v743 = vmul.f32 %v725, 1.442695
  %v744 = vpow.pop %v743
  %v745 = vmul.f32 %v727, 1.442695
  %v746 = vpow.pop %v745
  %v747 = vmul.f32 %v730, 1.442695
  %v748 = vpow.pop %v747
  %v749 = vmul.f32 %v732, 1.442695
  %v750 = vpow.pop %v749
  %v751 = vmul.f32 %v735, 1.442695
  %v752 = vpow.pop %v751
  %v753 = vmul.f32 %v737, 1.442695
  %v754 = vpow.pop %v753
  %v755 = vsel %vm238, %v740, 0.0
  %756 = vadd.xlane.f32.xlu0 %v755
  %v757 = vpop.xlane.xlu0 %756
  %v758 = vsel %vm238, %v742, 0.0
  %759 = vadd.xlane.f32.xlu0 %v758
  %v760 = vpop.xlane.xlu0 %759
  %v761 = vsel %vm238, %v744, 0.0
  %762 = vadd.xlane.f32.xlu0 %v761
  %v763 = vpop.xlane.xlu0 %762
  %v764 = vsel %vm238, %v746, 0.0
  %765 = vadd.xlane.f32.xlu0 %v764
  %v766 = vpop.xlane.xlu0 %765
  %v767 = vsel %vm238, %v748, 0.0
  %768 = vadd.xlane.f32.xlu0 %v767
  %v769 = vpop.xlane.xlu0 %768
  %v770 = vsel %vm238, %v750, 0.0
  %771 = vadd.xlane.f32.xlu0 %v770
  %v772 = vpop.xlane.xlu0 %771
  %v773 = vsel %vm238, %v752, 0.0
  %774 = vadd.xlane.f32.xlu0 %v773
  %v775 = vpop.xlane.xlu0 %774
  %v776 = vsel %vm238, %v754, 0.0
  %777 = vadd.xlane.f32.xlu0 %v776
  %v778 = vpop.xlane.xlu0 %777
  %v779 = vmax.f32 %v757, 1e-20
  %v780 = vmax.f32 %v760, 1e-20
  %v781 = vmax.f32 %v763, 1e-20
  %v782 = vmax.f32 %v766, 1e-20
  %v783 = vmax.f32 %v769, 1e-20
  %v784 = vmax.f32 %v772, 1e-20
  %v785 = vmax.f32 %v775, 1e-20
  %v786 = vmax.f32 %v778, 1e-20
  %v787 = vrcp.pop %v779
  %v788 = vrcp.pop %v780
  %v789 = vrcp.pop %v781
  %v790 = vrcp.pop %v782
  %v791 = vrcp.pop %v783
  %v792 = vrcp.pop %v784
  %v793 = vrcp.pop %v785
  %v794 = vrcp.pop %v786
  %v795 = vmul.f32 %v740, %v787
  %v796 = vmul.f32 %v742, %v788
  %v797 = vmul.f32 %v744, %v789
  %v798 = vmul.f32 %v746, %v790
  %v799 = vmul.f32 %v748, %v791
  %v800 = vmul.f32 %v750, %v792
  %v801 = vmul.f32 %v752, %v793
  %v802 = vmul.f32 %v754, %v794
  %v803 = vpack.c.bf16 %v796, %v795
  %v804 = vpack.c.bf16 %v798, %v797
  %v805 = vpack.c.bf16 %v800, %v799
  %v806 = vpack.c.bf16 %v802, %v801
  %807 = vrot.lane.b32.xlu0 %v670, 64
  %v808 = vpop.permute.xlu0 %807
  %809 = vrot.lane.b32.xlu0 %v671, 64
  %v810 = vpop.permute.xlu0 %809
  %811 = vrot.lane.b32.xlu0 %v672, 64
  %v812 = vpop.permute.xlu0 %811
  %813 = vrot.lane.b32.xlu0 %v673, 64
  %v814 = vpop.permute.xlu0 %813
  %v820 = vsel %vm238, %v803, 0
  %v823 = vsel %vm238, %v804, 0
  %v826 = vsel %vm238, %v805, 0
  %v829 = vsel %vm238, %v806, 0
  %831 = vmatpush.bf16.msra.mxu0 0
  %832 = vmatpush.bf16.msra.mxu0 0
  %833 = vmatpush.bf16.msra.mxu0 0
  %834 = vmatpush.bf16.msra.mxu0 0
  %835 = vmatpush.bf16.msra.mxu0 %v814
  %836 = vmatpush.bf16.msra.mxu0 %v812
  %837 = vmatpush.bf16.msra.mxu0 %v810
  %838 = vmatpush.bf16.msra.mxu0 %v808
  %839 = vmatmul.bf16.gmra.mxu0 %v820
  %v840 = vpop.f32.mrf.mxu0
  %v841 = vadd.f32 0.0, %v840
  %v842 = vpop.f32.mrf.mxu0
  %v843 = vadd.f32 0.0, %v842
  %844 = vmatmul.bf16.gmra.mxu0 %v823
  %v845 = vpop.f32.mrf.mxu0
  %v846 = vadd.f32 0.0, %v845
  %v847 = vpop.f32.mrf.mxu0
  %v848 = vadd.f32 0.0, %v847
  %849 = vmatmul.bf16.gmra.mxu0 %v826
  %v850 = vpop.f32.mrf.mxu0
  %v851 = vadd.f32 0.0, %v850
  %v852 = vpop.f32.mrf.mxu0
  %v853 = vadd.f32 0.0, %v852
  %854 = vmatmul.bf16.gmra.mxu0 %v829
  %v855 = vpop.f32.mrf.mxu0
  %v856 = vadd.f32 0.0, %v855
  %v857 = vpop.f32.mrf.mxu0
  %v858 = vadd.f32 0.0, %v857
  %859 = vdwg.mxu0
  %862 = vrot.lane.b32.xlu0 %v846, 8
  %v863 = vpop.permute.xlu0 %862
  %864 = vrot.lane.b32.xlu0 %v848, 8
  %v865 = vpop.permute.xlu0 %864
  %870 = vrot.lane.b32.xlu0 %v851, 16
  %v871 = vpop.permute.xlu0 %870
  %872 = vrot.lane.b32.xlu0 %v853, 16
  %v873 = vpop.permute.xlu0 %872
  %878 = vrot.lane.b32.xlu0 %v856, 24
  %v879 = vpop.permute.xlu0 %878
  %880 = vrot.lane.b32.xlu0 %v858, 24
  %v881 = vpop.permute.xlu0 %880
  %v884 = vsel %vm168, %v841, %v863
  %v885 = vsel %vm168, %v843, %v865
  %v886 = vsel %vm370, %v884, %v871
  %v887 = vsel %vm370, %v885, %v873
  %v888 = vsel %vm373, %v886, %v879
  %v889 = vsel %vm373, %v887, %v881
  %v890 = vpack.c.bf16 %v889, %v888
  %891 = vrot.lane.b32.xlu0 %v629, 32
  %v892 = vpop.permute.xlu0 %891
  %893 = vrot.lane.b32.xlu0 %v630, 32
  %v894 = vpop.permute.xlu0 %893
  %898 = vrot.lane.b32.xlu0 %v620, 32
  %v899 = vpop.permute.xlu0 %898
  %v902 = vsel %vm29, %v890, 0
  %904 = vmatpush.bf16.msra.mxu0 0
  %905 = vmatpush.bf16.msra.mxu0 0
  %906 = vmatpush.bf16.msra.mxu0 0
  %907 = vmatpush.bf16.msra.mxu0 0
  %908 = vmatpush.bf16.msra.mxu0 0
  %909 = vmatpush.bf16.msra.mxu0 0
  %910 = vmatpush.bf16.msra.mxu0 %v894
  %911 = vmatpush.bf16.msra.mxu0 %v892
  %912 = vmatmul.bf16.gmra.mxu0 %v902
  %v913 = vpop.f32.mrf.mxu0
  %v914 = vadd.f32 %v899, %v913
  %v915 = vpop.f32.mrf.mxu0
  %v916 = vadd.f32 %v899, %v915
  %917 = vdwg.mxu0
  %v918 = vadd.f32 %v612, %v914
  %v919 = vadd.f32 %v613, %v916
  %v920 = vld [vmem:[%s3 + $0x6] sm:$0x1]
  %v921 = vsel %vm29, %v918, 0.0
  %922 = vadd.xlane.f32.xlu0 %v921
  %v923 = vpop.xlane.xlu0 %922
  %v924 = vsel %vm29, %v919, 0.0
  %925 = vadd.xlane.f32.xlu0 %v924
  %v926 = vpop.xlane.xlu0 %925
  %v927 = vmul.f32 %v923, %v42
  %v928 = vmul.f32 %v926, %v42
  %v929 = vmul.f32 %v918, %v918
  %v930 = vmul.f32 %v919, %v919
  %v931 = vsel %vm29, %v929, 0.0
  %932 = vadd.xlane.f32.xlu0 %v931
  %v933 = vpop.xlane.xlu0 %932
  %v934 = vsel %vm29, %v930, 0.0
  %935 = vadd.xlane.f32.xlu0 %v934
  %v936 = vpop.xlane.xlu0 %935
  %v937 = vmul.f32 %v933, %v42
  %v938 = vmul.f32 %v936, %v42
  %v939 = vmul.f32 %v927, %v927
  %v940 = vmul.f32 %v928, %v928
  %v941 = vsub.f32 %v937, %v939
  %v942 = vsub.f32 %v938, %v940
  %v943 = vmax.f32 %v941, 0.0
  %v944 = vmax.f32 %v942, 0.0
  %v945 = vsub.f32 %v918, %v927
  %v946 = vsub.f32 %v919, %v928
  %v947 = vadd.f32 %v943, 1e-12
  %v948 = vadd.f32 %v944, 1e-12
  %v949 = vrsqrt.pop %v947
  %v950 = vmul.f32 %v949, %v947
  %v951 = vmul.f32 %v950, %v949
  %v952 = vmul.f32 0.5, %v951
  %v953 = vsub.f32 1.5, %v952
  %v954 = vmul.f32 %v949, %v953
  %vm955 = vweird.f32 %v947
  %vm956 = vweird.f32 %v949
  %vm957 = vmor %vm955, %vm956
  %v958 = vsel %vm957, %v949, %v954
  %v959 = vrsqrt.pop %v948
  %v960 = vmul.f32 %v959, %v948
  %v961 = vmul.f32 %v960, %v959
  %v962 = vmul.f32 0.5, %v961
  %v963 = vsub.f32 1.5, %v962
  %v964 = vmul.f32 %v959, %v963
  %vm965 = vweird.f32 %v948
  %vm966 = vweird.f32 %v959
  %vm967 = vmor %vm965, %vm966
  %v968 = vsel %vm967, %v959, %v964
  %v969 = vmul.f32 %v945, %v958
  %v970 = vmul.f32 %v946, %v968
  %v971 = vperm.slane %v920, 0
  %v972 = vmul.f32 %v969, %v971
  %v973 = vmul.f32 %v970, %v971
  %975 = vrot.lane.b32.xlu0 %v971, 96
  %v976 = vpop.permute.xlu0 %975
  %v978 = vadd.f32 %v972, %v976
  %v979 = vadd.f32 %v973, %v976
  %v980 = vpack.c.bf16 %v979, %v978
  %v981 = vld [vmem:[%s2 + $0x30] sm:$0xf]
  %v982 = vld [vmem:[%s2 + $0x34] sm:$0xf]
  %v983 = vld [vmem:[%s2 + $0x38] sm:$0xf]
  %v984 = vld [vmem:[%s2 + $0x3c] sm:$0xf]
  %v985 = vld [vmem:[%s3 + $0x7] sm:$0x1]
  %v986 = vperm.slane %v985, 0
  %v991 = vunpack.c.l.b16 %v981
  %v992 = vunpack.c.l.b16 %v982
  %v993 = vunpack.c.l.b16 %v983
  %v994 = vunpack.c.l.b16 %v984
  %v995 = vpack.c.b16 %v992, %v991
  %v996 = vpack.c.b16 %v994, %v993
  %v1000 = vsel %vm29, %v980, 0
  %1002 = vmatpush.bf16.msra.mxu0 0
  %1003 = vmatpush.bf16.msra.mxu0 0
  %1004 = vmatpush.bf16.msra.mxu0 0
  %1005 = vmatpush.bf16.msra.mxu0 0
  %1006 = vmatpush.bf16.msra.mxu0 0
  %1007 = vmatpush.bf16.msra.mxu0 0
  %1008 = vmatpush.bf16.msra.mxu0 %v996
  %1009 = vmatpush.bf16.msra.mxu0 %v995
  %1010 = vmatmul.bf16.gmra.mxu0 %v1000
  %v1011 = vpop.f32.mrf.mxu0
  %v1012 = vadd.f32 %v986, %v1011
  %v1013 = vpop.f32.mrf.mxu0
  %v1014 = vadd.f32 %v986, %v1013
  %1015 = vdwg.mxu0
  %v1016 = vmul.f32 %v1012, 0.5
  %v1017 = vmul.f32 %v1014, 0.5
  %v1018 = vmul.f32 %v1012, 0.044715
  %v1019 = vmul.f32 %v1014, 0.044715
  %v1020 = vmul.f32 %v1018, %v1012
  %v1021 = vmul.f32 %v1019, %v1014
  %v1022 = vmul.f32 %v1020, %v1012
  %v1023 = vmul.f32 %v1021, %v1014
  %v1024 = vadd.f32 %v1012, %v1022
  %v1025 = vadd.f32 %v1014, %v1023
  %v1026 = vmul.f32 %v1024, 0.7978846
  %v1027 = vmul.f32 %v1025, 0.7978846
  %v1028 = vtanh.pop %v1026
  %v1029 = vtanh.pop %v1027
  %v1030 = vadd.f32 %v1028, 1.0
  %v1031 = vadd.f32 %v1029, 1.0
  %v1032 = vmul.f32 %v1016, %v1030
  %v1033 = vmul.f32 %v1017, %v1031
  %v1034 = vpack.c.bf16 %v1033, %v1032
  %1035 = vrot.lane.b32.xlu0 %v995, 64
  %v1036 = vpop.permute.xlu0 %1035
  %1037 = vrot.lane.b32.xlu0 %v996, 64
  %v1038 = vpop.permute.xlu0 %1037
  %1040 = vrot.lane.b32.xlu0 %v986, 64
  %v1041 = vpop.permute.xlu0 %1040
  %v1044 = vsel %vm238, %v1034, 0
  %v1047 = vsel %vm238, %v1036, 0
  %v1050 = vsel %vm238, %v1038, 0
  %1052 = vmatpush.bf16.xpose.msra.mxu0 0
  %1053 = vmatpush.bf16.xpose.msra.mxu0 0
  %1054 = vmatpush.bf16.xpose.msra.mxu0 0
  %1055 = vmatpush.bf16.xpose.msra.mxu0 0
  %1056 = vmatpush.bf16.xpose.msra.mxu0 0
  %1057 = vmatpush.bf16.xpose.msra.mxu0 0
  %1058 = vmatpush.bf16.xpose.msra.mxu0 %v1050
  %1059 = vmatpush.bf16.xpose.msra.mxu0 %v1047
  %1060 = vmatmul.bf16.gmra.mxu0 %v1044
  %v1061 = vpop.f32.mrf.mxu0
  %v1062 = vadd.f32 %v1041, %v1061
  %v1063 = vpop.f32.mrf.mxu0
  %v1064 = vadd.f32 %v1041, %v1063
  %1065 = vdwg.mxu0
  %v1066 = vadd.f32 %v978, %v1062
  %v1067 = vadd.f32 %v979, %v1064
  %v1068 = vsel %vm29, %v1066, 0.0
  %1069 = vadd.xlane.f32.xlu0 %v1068
  %v1070 = vpop.xlane.xlu0 %1069
  %v1071 = vsel %vm29, %v1067, 0.0
  %1072 = vadd.xlane.f32.xlu0 %v1071
  %v1073 = vpop.xlane.xlu0 %1072
  %v1074 = vmul.f32 %v1070, %v42
  %v1075 = vmul.f32 %v1073, %v42
  %v1076 = vmul.f32 %v1066, %v1066
  %v1077 = vmul.f32 %v1067, %v1067
  %v1078 = vsel %vm29, %v1076, 0.0
  %1079 = vadd.xlane.f32.xlu0 %v1078
  %v1080 = vpop.xlane.xlu0 %1079
  %v1081 = vsel %vm29, %v1077, 0.0
  %1082 = vadd.xlane.f32.xlu0 %v1081
  %v1083 = vpop.xlane.xlu0 %1082
  %v1084 = vmul.f32 %v1080, %v42
  %v1085 = vmul.f32 %v1083, %v42
  %v1086 = vmul.f32 %v1074, %v1074
  %v1087 = vmul.f32 %v1075, %v1075
  %v1088 = vsub.f32 %v1084, %v1086
  %v1089 = vsub.f32 %v1085, %v1087
  %v1090 = vmax.f32 %v1088, 0.0
  %v1091 = vmax.f32 %v1089, 0.0
  %v1092 = vsub.f32 %v1066, %v1074
  %v1093 = vsub.f32 %v1067, %v1075
  %v1094 = vadd.f32 %v1090, 1e-12
  %v1095 = vadd.f32 %v1091, 1e-12
  %v1096 = vrsqrt.pop %v1094
  %v1097 = vmul.f32 %v1096, %v1094
  %v1098 = vmul.f32 %v1097, %v1096
  %v1099 = vmul.f32 0.5, %v1098
  %v1100 = vsub.f32 1.5, %v1099
  %v1101 = vmul.f32 %v1096, %v1100
  %vm1102 = vweird.f32 %v1094
  %vm1103 = vweird.f32 %v1096
  %vm1104 = vmor %vm1102, %vm1103
  %v1105 = vsel %vm1104, %v1096, %v1101
  %v1106 = vrsqrt.pop %v1095
  %v1107 = vmul.f32 %v1106, %v1095
  %v1108 = vmul.f32 %v1107, %v1106
  %v1109 = vmul.f32 0.5, %v1108
  %v1110 = vsub.f32 1.5, %v1109
  %v1111 = vmul.f32 %v1106, %v1110
  %vm1112 = vweird.f32 %v1095
  %vm1113 = vweird.f32 %v1106
  %vm1114 = vmor %vm1112, %vm1113
  %v1115 = vsel %vm1114, %v1106, %v1111
  %v1116 = vmul.f32 %v1092, %v1105
  %v1117 = vmul.f32 %v1093, %v1115
  %1118 = vrot.lane.b32.xlu0 %v971, 64
  %v1119 = vpop.permute.xlu0 %1118
  %v1121 = vmul.f32 %v1116, %v1119
  %v1122 = vmul.f32 %v1117, %v1119
  %1123 = vrot.lane.b32.xlu0 %v971, 32
  %v1124 = vpop.permute.xlu0 %1123
  %v1126 = vadd.f32 %v1121, %v1124
  %v1127 = vadd.f32 %v1122, %v1124
  %v1128 = vld [vmem:[%s2 + $0x40] sm:$0xf]
  %v1129 = vld [vmem:[%s2 + $0x44] sm:$0xf]
  %v1130 = vld [vmem:[%s2 + $0x48] sm:$0xf]
  %v1131 = vld [vmem:[%s2 + $0x4c] sm:$0xf]
  %v1132 = vpack.c.bf16 %v1127, %v1126
  %v1137 = vunpack.c.l.b16 %v1128
  %v1138 = vunpack.c.l.b16 %v1129
  %v1139 = vunpack.c.l.b16 %v1130
  %v1140 = vunpack.c.l.b16 %v1131
  %v1141 = vpack.c.b16 %v1138, %v1137
  %v1142 = vpack.c.b16 %v1140, %v1139
  %1143 = vrot.lane.b32.xlu0 %v1141, 64
  %v1144 = vpop.permute.xlu0 %1143
  %1145 = vrot.lane.b32.xlu0 %v1142, 64
  %v1146 = vpop.permute.xlu0 %1145
  %1149 = vrot.lane.b32.xlu0 %v87, 64
  %v1150 = vpop.permute.xlu0 %1149
  %v1153 = vsel %vm29, %v1132, 0
  %1155 = vmatpush.bf16.msra.mxu0 0
  %1156 = vmatpush.bf16.msra.mxu0 0
  %1157 = vmatpush.bf16.msra.mxu0 0
  %1158 = vmatpush.bf16.msra.mxu0 0
  %1159 = vmatpush.bf16.msra.mxu0 0
  %1160 = vmatpush.bf16.msra.mxu0 0
  %1161 = vmatpush.bf16.msra.mxu0 %v1146
  %1162 = vmatpush.bf16.msra.mxu0 %v1144
  %1163 = vmatmul.bf16.gmra.mxu0 %v1153
  %v1164 = vpop.f32.mrf.mxu0
  %v1165 = vadd.f32 %v1150, %v1164
  %v1166 = vpop.f32.mrf.mxu0
  %v1167 = vadd.f32 %v1150, %v1166
  %1168 = vdwg.mxu0
  %v1169 = vtanh.pop %v1165
  %v1170 = vtanh.pop %v1167
  %v1171 = vpack.c.bf16 %v1170, %v1169
  %v1172 = vld [vmem:[%s3 + $0x1] sm:$0x1]
  %v1173 = vperm.slane %v1172, 0
  %v1177 = vsel %vm29, %v1171, 0
  %1179 = vmatpush.bf16.msra.mxu0 0
  %1180 = vmatpush.bf16.msra.mxu0 0
  %1181 = vmatpush.bf16.msra.mxu0 0
  %1182 = vmatpush.bf16.msra.mxu0 0
  %1183 = vmatpush.bf16.msra.mxu0 0
  %1184 = vmatpush.bf16.msra.mxu0 0
  %1185 = vmatpush.bf16.msra.mxu0 %v1142
  %1186 = vmatpush.bf16.msra.mxu0 %v1141
  %1187 = vmatmul.bf16.gmra.mxu0 %v1177
  %v1188 = vpop.f32.mrf.mxu0
  %v1189 = vadd.f32 %v1173, %v1188
  %v1190 = vpop.f32.mrf.mxu0
  %v1191 = vadd.f32 %v1173, %v1190
  %1192 = vdwg.mxu0
  %v1193 = vsub.f32 0.0, %v1189
  %v1194 = vsub.f32 0.0, %v1191
  %v1195 = vmul.f32 %v1193, 1.442695
  %v1196 = vpow.pop %v1195
  %v1197 = vmul.f32 %v1194, 1.442695
  %v1198 = vpow.pop %v1197
  %v1199 = vadd.f32 %v1196, 1.0
  %v1200 = vadd.f32 %v1198, 1.0
  %v1201 = vrcp.pop %v1199
  %v1202 = vmul.f32 %v1199, %v1201
  %v1203 = vsub.f32 1.0, %v1202
  %v1204 = vmul.f32 %v1201, %v1203
  %v1205 = vadd.f32 %v1201, %v1204
  %vm1206 = vweird.f32 %v1199
  %vm1207 = vweird.f32 %v1201
  %vm1208 = vmor %vm1206, %vm1207
  %v1209 = vsel %vm1208, %v1201, %v1205
  %v1210 = vand.u32 2147483647, %v1199
  %vm1211 = vcmp.eq.f32.partialorder %v1210, 8.507059e+37
  %v1212 = vand.u32 %v1199, 2147483648
  %v1213 = vor.u32 1.1754944e-38, %v1212
  %v1214 = vsel %vm1211, %v1213, %v1209
  %v1215 = vmul.f32 1.0, %v1214
  %v1216 = vrcp.pop %v1200
  %v1217 = vmul.f32 %v1200, %v1216
  %v1218 = vsub.f32 1.0, %v1217
  %v1219 = vmul.f32 %v1216, %v1218
  %v1220 = vadd.f32 %v1216, %v1219
  %vm1221 = vweird.f32 %v1200
  %vm1222 = vweird.f32 %v1216
  %vm1223 = vmor %vm1221, %vm1222
  %v1224 = vsel %vm1223, %v1216, %v1220
  %v1225 = vand.u32 2147483647, %v1200
  %vm1226 = vcmp.eq.f32.partialorder %v1225, 8.507059e+37
  %v1227 = vand.u32 %v1200, 2147483648
  %v1228 = vor.u32 1.1754944e-38, %v1227
  %v1229 = vsel %vm1226, %v1228, %v1224
  %v1230 = vmul.f32 1.0, %v1229
  %1231 = vst [vmem:[%s4] sm:$0xff] %v1215
  %1232 = vst [vmem:[%s4 + $0x8] sm:$0xff] %v1230
  // Predicated region
  $region18: #{aspect_prediction_forward.1} parent=0 // pred_check
    _
  $region19: #{aspect_prediction_forward.1} parent=0 // pred_check_branch
    %1234 = sbr.rel (0) target = $region21
  $region20: #{aspect_prediction_forward.1} parent=0 // pred_region
    _
  $region21: #{aspect_prediction_forward.1} parent=0 // pred_fallthru
    _
  // Predicated region
  $region22: #{aspect_prediction_forward.1} parent=0 // pred_check
    _
  $region23: #{aspect_prediction_forward.1} parent=0 // pred_check_branch
    %1236 = sbr.rel (0) target = $region25
  $region24: #{aspect_prediction_forward.1} parent=0 // pred_region
    _
  $region25: #{aspect_prediction_forward.1} parent=0 // pred_fallthru
    _

</llo_original>
